<compile_context>
chip_gen: v6e
topology: v6e:2x2x1
jax: 0.10.0
libtpu: 0.0.40
codegen_flags: <defaults>
</compile_context>

<pallas_src>
import math
from functools import partial

import jax
import jax.numpy as jnp
from jax.experimental import pallas as pl
from jax.experimental.pallas import tpu as pltpu


# Row indices inside the packed (8, D) f32 vector array.
_LN0_G, _LN0_B, _LN1_G, _LN1_B, _LN2_G, _LN2_B, _BO, _B2 = range(8)


def _layernorm(z, g, b, eps=1e-5):
    mu = jnp.mean(z, axis=-1, keepdims=True)
    var = jnp.mean(jnp.square(z - mu), axis=-1, keepdims=True)
    return (z - mu) * jax.lax.rsqrt(var + eps) * g + b


def transformer_layer_kernel(
    x_ref, mask_kb_ref, mask_pool_ref, pos_ref, vecs_ref,
    wqkv_ref, bqkv_ref, wo_ref,
    w1_ref, b1_ref, w2_ref,
    out_ref,
    *, nhead,
):
    Bt, M, D = x_ref.shape
    R = Bt * M
    hd = D // nhead
    scale = 1.0 / math.sqrt(hd)
    bf16 = jnp.bfloat16

    x = x_ref[...]                          # (Bt, M, D) f32
    kb = mask_kb_ref[...]                   # (Bt, 1, M) f32, 1.0 where statement_mask True
    pos = pos_ref[...]                      # (M, D) f32
    vecs = vecs_ref[...]                    # (8, D) f32 packed vectors

    # x_with_pos = self.norm(x + pos_emb); fold (Bt, M) into the matmul row axis.
    h = _layernorm((x + pos[None, :, :]).reshape(R, D),
                   vecs[_LN0_G:_LN0_G + 1, :], vecs[_LN0_B:_LN0_B + 1, :])   # (R, D) f32

    # Fused QKV projection: bf16 MXU operands, f32 accumulation.
    qkv = jnp.dot(h.astype(bf16), wqkv_ref[...],
                  preferred_element_type=jnp.float32) + bqkv_ref[...]        # (R, 3D) f32
    qkv_bf = qkv.astype(bf16).reshape(Bt, M, 3 * D)

    # Key-padding bias (src_key_padding_mask = ~statement_mask), broadcast ONCE and
    # reused by every head (JAX does not CSE broadcast_in_dim inside the unrolled loop).
    key_bias = jnp.broadcast_to(
        jnp.where(kb > 0.0, jnp.float32(0.0), jnp.float32(-1e30)), (Bt, M, M))

    # Multi-head self-attention.  Head contexts are concatenated (XLU work that
    # overlaps with MXU) and pushed through ONE full-depth (R,D)@(D,D) out-projection
    # matmul instead of six depth-8 matmuls + VPU accumulates.
    ctx_heads = []
    for hh in range(nhead):
        lo = hh * hd
        qh = qkv_bf[:, :, lo:lo + hd]                          # (Bt, M, hd)
        kh = qkv_bf[:, :, D + lo:D + lo + hd]
        vh = qkv_bf[:, :, 2 * D + lo:2 * D + lo + hd]
        s = jnp.einsum("bqd,bkd->bqk", qh, kh,
                       preferred_element_type=jnp.float32) * scale + key_bias
        s = s - jnp.max(s, axis=-1, keepdims=True)             # softmax in f32
        p = jnp.exp(s)
        p = p * pl.reciprocal(jnp.sum(p, axis=-1, keepdims=True), approx=True)
        ctx_heads.append(jnp.einsum("bqk,bkd->bqd", p.astype(bf16), vh,
                                    preferred_element_type=jnp.float32))
    ctx = jnp.concatenate(ctx_heads, axis=-1).reshape(R, D)    # (R, D) f32, head-major
    attn = jnp.dot(ctx.astype(bf16), wo_ref[...],
                   preferred_element_type=jnp.float32) + vecs[_BO:_BO + 1, :]

    # Post-norm encoder layer (PyTorch default norm_first=False, activation=relu).
    h1 = _layernorm(h + attn, vecs[_LN1_G:_LN1_G + 1, :], vecs[_LN1_B:_LN1_B + 1, :])
    ff = jnp.maximum(
        jnp.dot(h1.astype(bf16), w1_ref[...],
                preferred_element_type=jnp.float32) + b1_ref[...], 0.0)
    ff = jnp.dot(ff.astype(bf16), w2_ref[...],
                 preferred_element_type=jnp.float32) + vecs[_B2:_B2 + 1, :]
    h2 = _layernorm(h1 + ff, vecs[_LN2_G:_LN2_G + 1, :], vecs[_LN2_B:_LN2_B + 1, :])

    # Masked mean pooling (valid = ~statement_mask) on the VPU: mask-multiply +
    # sublane reduce over M; count divide is exact (one scalar per batch row).
    pw = 1.0 - mask_pool_ref[...]                              # (Bt, M, 1)
    summed = jnp.sum(h2.reshape(Bt, M, D) * pw, axis=1)        # (Bt, D)
    cnt = jnp.maximum(jnp.sum(pw, axis=1), 1.0)                # (Bt, 1)
    out_ref[...] = (summed / cnt).astype(out_ref.dtype)


def _pick_block_b(B, M, block_b, target_rows, min_grid_steps):
    if block_b is None:
        block_b = max(1, pl.cdiv(target_rows, M))      # >= target_rows matmul rows/step
    if min_grid_steps > 1:                              # e.g. v7x: 2 TensorCores
        block_b = min(block_b, max(1, pl.cdiv(B, min_grid_steps)))
    if block_b >= B:
        return B                                        # single step; block == full dim
    # Multi-step grid: batch block a multiple of 8 so the dense (block_b, D) output
    # block satisfies the (8, 128) rule and stores are sublane-dense.
    block_b = max(8, (block_b // 8) * 8)
    return min(block_b, B)


@partial(jax.jit, static_argnames=("nhead", "block_b", "target_rows", "min_grid_steps"))
def transformer_layer(x, statement_mask, params, nhead, *, block_b=None,
                      target_rows=512, min_grid_steps=1):
    B, M, D = x.shape
    F = params["w1"].shape[1]

    block_b = _pick_block_b(B, M, block_b, target_rows, min_grid_steps)
    Bp = pl.cdiv(B, block_b) * block_b
    pad = Bp - B
    if pad:
        x = jnp.pad(x, ((0, pad), (0, 0), (0, 0)))
        statement_mask = jnp.pad(statement_mask, ((0, pad), (0, 0)))

    mask_f = statement_mask.astype(jnp.float32)
    mask_kb = mask_f.reshape(Bp, 1, M)      # attention key-padding layout
    mask_pool = mask_f.reshape(Bp, M, 1)    # pooling layout (avoids in-kernel transpose)
    pos = params["pos_emb"][:M]             # (M, D)

    # Host-side packing (done once under jit): fused QKV, packed (8, D) vectors,
    # bf16 weights for the MXU; biases / LN params stay f32.
    bf16 = jnp.bfloat16
    w_qkv = jnp.concatenate([params["wq"], params["wk"], params["wv"]],
                            axis=1).astype(bf16)                                  # (D, 3D)
    b_qkv = jnp.concatenate([params["bq"], params["bk"], params["bv"]], axis=1)   # (1, 3D)
    vecs = jnp.concatenate(
        [params["ln0_g"], params["ln0_b"],
         params["ln1_g"], params["ln1_b"],
         params["ln2_g"], params["ln2_b"],
         params["bo"], params["b2"]], axis=0)                                      # (8, D)
    w_o = params["wo"].astype(bf16)
    w_1 = params["w1"].astype(bf16)
    w_2 = params["w2"].astype(bf16)

    # Rough per-step VMEM live set (x block + qkv + key_bias + working activations +
    # double-buffered weights); set the scoped limit explicitly so larger batch
    # blocks don't trip the default (matters most under v7x's 64 MiB VMEM).
    R = block_b * M
    est = 4 * (2 * block_b * M * D + block_b * M * M + R * (6 * D + 2 * F)
               + 2 * block_b * D + M * D + 8 * D + 3 * D + F) \
        + 2 * 2 * (3 * D * D + D * D + 2 * D * F)
    vmem_limit = int(min(max(2 * est, 32 * 1024 * 1024), 48 * 1024 * 1024))

    def rep(shape):
        n = len(shape)
        return pl.BlockSpec(shape, lambda b, n=n: (0,) * n)

    out = pl.pallas_call(
        partial(transformer_layer_kernel, nhead=nhead),
        grid=(Bp // block_b,),
        in_specs=[
            pl.BlockSpec((block_b, M, D), lambda b: (b, 0, 0)),   # x
            pl.BlockSpec((block_b, 1, M), lambda b: (b, 0, 0)),   # mask, key-padding layout
            pl.BlockSpec((block_b, M, 1), lambda b: (b, 0, 0)),   # mask, pooling layout
            rep((M, D)),                                          # pos embeddings (f32)
            rep((8, D)),                                          # packed LN/bias vectors
            rep((D, 3 * D)), rep((1, 3 * D)),                     # fused QKV (bf16 W, f32 b)
            rep((D, D)),                                          # out_proj weight (bf16)
            rep((D, F)), rep((1, F)),                             # linear1 (bf16 W, f32 b)
            rep((F, D)),                                          # linear2 weight (bf16)
        ],
        out_specs=pl.BlockSpec((block_b, D), lambda b: (b, 0)),
        out_shape=jax.ShapeDtypeStruct((Bp, D), jnp.float32),
        compiler_params=pltpu.CompilerParams(
            dimension_semantics=("parallel",),
            vmem_limit_bytes=vmem_limit),
    )(x, mask_kb, mask_pool, pos, vecs, w_qkv, b_qkv, w_o, w_1, params["b1"], w_2)
    return out[:B]


def reference(x, statement_mask, params, nhead):
    """Pure-JAX f32 reference mirroring the PyTorch forward (eval mode)."""
    B, M, D = x.shape
    hd = D // nhead

    def ln(z, g, b):
        mu = z.mean(-1, keepdims=True)
        var = ((z - mu) ** 2).mean(-1, keepdims=True)
        return (z - mu) / jnp.sqrt(var + 1e-5) * g + b

    h = ln(x + params["pos_emb"][:M][None], params["ln0_g"], params["ln0_b"])
    q = h @ params["wq"] + params["bq"]
    k = h @ params["wk"] + params["bk"]
    v = h @ params["wv"] + params["bv"]
    qh = q.reshape(B, M, nhead, hd).transpose(0, 2, 1, 3)
    kh = k.reshape(B, M, nhead, hd).transpose(0, 2, 1, 3)
    vh = v.reshape(B, M, nhead, hd).transpose(0, 2, 1, 3)
    s = jnp.einsum("bhqd,bhkd->bhqk", qh, kh) / math.sqrt(hd)
    s = jnp.where(statement_mask[:, None, None, :], s, -1e30)
    p = jax.nn.softmax(s, axis=-1)
    attn = jnp.einsum("bhqk,bhkd->bhqd", p, vh).transpose(0, 2, 1, 3).reshape(B, M, D)
    attn = attn @ params["wo"] + params["bo"]
    h1 = ln(h + attn, params["ln1_g"], params["ln1_b"])
    ff = jax.nn.relu(h1 @ params["w1"] + params["b1"]) @ params["w2"] + params["b2"]
    h2 = ln(h1 + ff, params["ln2_g"], params["ln2_b"])
    valid = (~statement_mask)[..., None].astype(jnp.float32)
    summed = (h2 * valid).sum(1)
    cnt = jnp.maximum(valid.sum(1), 1.0)
    return summed / cnt


if __name__ == "__main__":
    B, M, D, H, F = 2, 8, 48, 6, 128   # d_model=48 divisible by nhead=6; M<=30 pos embeddings

    key = jax.random.PRNGKey(0)
    keys = jax.random.split(key, 24)

    def nrm(k, shape, scale=0.1):
        return (scale * jax.random.normal(k, shape)).astype(jnp.float32)

    params = dict(
        pos_emb=nrm(keys[0], (30, D)),
        ln0_g=1.0 + nrm(keys[1], (1, D)), ln0_b=nrm(keys[2], (1, D)),
        wq=nrm(keys[3], (D, D)), wk=nrm(keys[4], (D, D)), wv=nrm(keys[5], (D, D)),
        bq=nrm(keys[6], (1, D)), bk=nrm(keys[7], (1, D)), bv=nrm(keys[8], (1, D)),
        wo=nrm(keys[9], (D, D)), bo=nrm(keys[10], (1, D)),
        ln1_g=1.0 + nrm(keys[11], (1, D)), ln1_b=nrm(keys[12], (1, D)),
        w1=nrm(keys[13], (D, F)), b1=nrm(keys[14], (1, F)),
        w2=nrm(keys[15], (F, D)), b2=nrm(keys[16], (1, D)),
        ln2_g=1.0 + nrm(keys[17], (1, D)), ln2_b=nrm(keys[18], (1, D)),
    )

    x = jax.random.normal(keys[19], (B, M, D), dtype=jnp.float32)
    statement_mask = jnp.array(
        [[True, True, True, False, False, True, False, False],
         [True, False, True, True, False, False, False, True]], dtype=bool)

    out = transformer_layer(x, statement_mask, params, nhead=H)
    jax.block_until_ready(out)

    ref = reference(x, statement_mask, params, H)
    assert out.shape == (B, D), out.shape
    # Tolerance re-baselined for bf16 MXU operands (f32 accumulation); LN/softmax/
    # pooling math stays f32, so errors are dominated by bf16 rounding of matmul inputs.
    err = float(jnp.abs(out - ref).max())
    assert jnp.allclose(out, ref, atol=3e-2, rtol=3e-2), err
    print("KERNEL_OK")
</pallas_src>

<mosaic_0001>
module attributes {stable_mosaic.version = 11 : i64} {
  func.func @transformer_layer_kernel(%arg0: i32, %arg1: memref<2x8x48xf32, #tpu.memory_space<vmem>>, %arg2: memref<2x1x8xf32, #tpu.memory_space<vmem>>, %arg3: memref<2x8x1xf32, #tpu.memory_space<vmem>>, %arg4: memref<8x48xf32, #tpu.memory_space<vmem>>, %arg5: memref<8x48xf32, #tpu.memory_space<vmem>>, %arg6: memref<48x144xbf16, #tpu.memory_space<vmem>>, %arg7: memref<1x144xf32, #tpu.memory_space<vmem>>, %arg8: memref<48x48xbf16, #tpu.memory_space<vmem>>, %arg9: memref<48x128xbf16, #tpu.memory_space<vmem>>, %arg10: memref<1x128xf32, #tpu.memory_space<vmem>>, %arg11: memref<128x48xbf16, #tpu.memory_space<vmem>>, %arg12: memref<2x48xf32, #tpu.memory_space<vmem>>) attributes {dimension_semantics = [#tpu.dimension_semantics<parallel>], iteration_bounds = array<i64: 1>, scalar_prefetch = 0 : i64, scratch_operands = 0 : i64, tpu.core_type = #tpu.core_type<tc>, window_params = [{transform_indices = @transform_0, window_bounds = array<i64: 2, 8, 48>}, {transform_indices = @transform_1, window_bounds = array<i64: 2, 1, 8>}, {transform_indices = @transform_2, window_bounds = array<i64: 2, 8, 1>}, {pipeline_mode = #tpu.pipeline_mode<synchronous>, transform_indices = @transform_3, window_bounds = array<i64: 8, 48>}, {pipeline_mode = #tpu.pipeline_mode<synchronous>, transform_indices = @transform_4, window_bounds = array<i64: 8, 48>}, {pipeline_mode = #tpu.pipeline_mode<synchronous>, transform_indices = @transform_5, window_bounds = array<i64: 48, 144>}, {pipeline_mode = #tpu.pipeline_mode<synchronous>, transform_indices = @transform_6, window_bounds = array<i64: 1, 144>}, {pipeline_mode = #tpu.pipeline_mode<synchronous>, transform_indices = @transform_7, window_bounds = array<i64: 48, 48>}, {pipeline_mode = #tpu.pipeline_mode<synchronous>, transform_indices = @transform_8, window_bounds = array<i64: 48, 128>}, {pipeline_mode = #tpu.pipeline_mode<synchronous>, transform_indices = @transform_9, window_bounds = array<i64: 1, 128>}, {pipeline_mode = #tpu.pipeline_mode<synchronous>, transform_indices = @transform_10, window_bounds = array<i64: 128, 48>}, {transform_indices = @transform_11, window_bounds = array<i64: 2, 48>}]} {
    %c0 = arith.constant 0 : index
    %c0_0 = arith.constant 0 : index
    %c0_1 = arith.constant 0 : index
    %0 = vector.load %arg1[%c0, %c0_0, %c0_1] : memref<2x8x48xf32, #tpu.memory_space<vmem>>, vector<2x8x48xf32>
    %c0_2 = arith.constant 0 : index
    %c0_3 = arith.constant 0 : index
    %c0_4 = arith.constant 0 : index
    %1 = vector.load %arg2[%c0_2, %c0_3, %c0_4] : memref<2x1x8xf32, #tpu.memory_space<vmem>>, vector<2x1x8xf32>
    %c0_5 = arith.constant 0 : index
    %c0_6 = arith.constant 0 : index
    %2 = vector.load %arg4[%c0_5, %c0_6] : memref<8x48xf32, #tpu.memory_space<vmem>>, vector<8x48xf32>
    %c0_7 = arith.constant 0 : index
    %c0_8 = arith.constant 0 : index
    %3 = vector.load %arg5[%c0_7, %c0_8] : memref<8x48xf32, #tpu.memory_space<vmem>>, vector<8x48xf32>
    %4 = vector.shape_cast %2 : vector<8x48xf32> to vector<1x8x48xf32>
    %5 = vector.broadcast %4 : vector<1x8x48xf32> to vector<2x8x48xf32>
    %6 = arith.addf %0, %5 : vector<2x8x48xf32>
    %7 = vector.shape_cast %6 : vector<2x8x48xf32> to vector<16x48xf32>
    %8 = vector.extract_strided_slice %3 {offsets = [0, 0], sizes = [1, 48], strides = [1, 1]} : vector<8x48xf32> to vector<1x48xf32>
    %9 = vector.extract_strided_slice %3 {offsets = [1, 0], sizes = [1, 48], strides = [1, 1]} : vector<8x48xf32> to vector<1x48xf32>
    %cst = arith.constant dense<0.000000e+00> : vector<16xf32>
    %10 = vector.multi_reduction <add>, %7, %cst [1] : vector<16x48xf32> to vector<16xf32>
    %11 = vector.shape_cast %10 : vector<16xf32> to vector<16x1xf32>
    %cst_9 = arith.constant 4.800000e+01 : f32
    %12 = vector.broadcast %cst_9 : f32 to vector<16x1xf32>
    %13 = arith.divf %11, %12 : vector<16x1xf32>
    %14 = vector.broadcast %13 : vector<16x1xf32> to vector<16x48xf32>
    %15 = arith.subf %7, %14 : vector<16x48xf32>
    %16 = arith.mulf %15, %15 : vector<16x48xf32>
    %cst_10 = arith.constant dense<0.000000e+00> : vector<16xf32>
    %17 = vector.multi_reduction <add>, %16, %cst_10 [1] : vector<16x48xf32> to vector<16xf32>
    %18 = vector.shape_cast %17 : vector<16xf32> to vector<16x1xf32>
    %cst_11 = arith.constant 4.800000e+01 : f32
    %19 = vector.broadcast %cst_11 : f32 to vector<16x1xf32>
    %20 = arith.divf %18, %19 : vector<16x1xf32>
    %21 = vector.broadcast %13 : vector<16x1xf32> to vector<16x48xf32>
    %22 = arith.subf %7, %21 : vector<16x48xf32>
    %cst_12 = arith.constant 9.99999974E-6 : f32
    %23 = vector.broadcast %cst_12 : f32 to vector<16x1xf32>
    %24 = arith.addf %20, %23 : vector<16x1xf32>
    %25 = math.rsqrt %24 : vector<16x1xf32>
    %26 = vector.broadcast %25 : vector<16x1xf32> to vector<16x48xf32>
    %27 = arith.mulf %22, %26 : vector<16x48xf32>
    %28 = vector.broadcast %8 : vector<1x48xf32> to vector<16x48xf32>
    %29 = arith.mulf %27, %28 : vector<16x48xf32>
    %30 = vector.broadcast %9 : vector<1x48xf32> to vector<16x48xf32>
    %31 = arith.addf %29, %30 : vector<16x48xf32>
    %32 = arith.truncf %31 : vector<16x48xf32> to vector<16x48xbf16>
    %c0_13 = arith.constant 0 : index
    %c0_14 = arith.constant 0 : index
    %33 = vector.load %arg6[%c0_13, %c0_14] : memref<48x144xbf16, #tpu.memory_space<vmem>>, vector<48x144xbf16>
    %cst_15 = arith.constant dense<0.000000e+00> : vector<16x144xf32>
    %34 = tpu.matmul %32, %33, %cst_15 {dimension_numbers = #tpu.dot_dimension_numbers<[1], [0], [0], [1], [0, 0, 1, 1], [], []>} : vector<16x48xbf16>, vector<48x144xbf16>, vector<16x144xf32> -> vector<16x144xf32>
    %c0_16 = arith.constant 0 : index
    %c0_17 = arith.constant 0 : index
    %35 = vector.load %arg7[%c0_16, %c0_17] : memref<1x144xf32, #tpu.memory_space<vmem>>, vector<1x144xf32>
    %36 = vector.broadcast %35 : vector<1x144xf32> to vector<16x144xf32>
    %37 = arith.addf %34, %36 : vector<16x144xf32>
    %38 = arith.truncf %37 : vector<16x144xf32> to vector<16x144xbf16>
    %39 = vector.shape_cast %38 : vector<16x144xbf16> to vector<2x8x144xbf16>
    %cst_18 = arith.constant 0.000000e+00 : f32
    %40 = vector.broadcast %cst_18 : f32 to vector<2x1x8xf32>
    %41 = arith.cmpf ogt, %1, %40 : vector<2x1x8xf32>
    %cst_19 = arith.constant 0.000000e+00 : f32
    %cst_20 = arith.constant -1.000000e+30 : f32
    %42 = vector.broadcast %cst_19 : f32 to vector<2x1x8xf32>
    %43 = vector.broadcast %cst_20 : f32 to vector<2x1x8xf32>
    %44 = arith.select %41, %42, %43 : vector<2x1x8xi1>, vector<2x1x8xf32>
    %45 = vector.shape_cast %44 : vector<2x1x8xf32> to vector<2x1x8xf32>
    %46 = vector.broadcast %45 : vector<2x1x8xf32> to vector<2x8x8xf32>
    %47 = vector.extract_strided_slice %39 {offsets = [0, 0, 0], sizes = [2, 8, 8], strides = [1, 1, 1]} : vector<2x8x144xbf16> to vector<2x8x8xbf16>
    %48 = vector.extract_strided_slice %39 {offsets = [0, 0, 48], sizes = [2, 8, 8], strides = [1, 1, 1]} : vector<2x8x144xbf16> to vector<2x8x8xbf16>
    %49 = vector.extract_strided_slice %39 {offsets = [0, 0, 96], sizes = [2, 8, 8], strides = [1, 1, 1]} : vector<2x8x144xbf16> to vector<2x8x8xbf16>
    "tpu.trace_start"() <{level = 10 : i32, message = "bqd,bkd->bqk"}> : () -> ()
    %cst_21 = arith.constant dense<0.000000e+00> : vector<2x8x8xf32>
    %50 = tpu.matmul %47, %48, %cst_21 {dimension_numbers = #tpu.dot_dimension_numbers<[2], [2], [1], [1], [0, 0, 0, 1, 1, 1], [0], [0]>} : vector<2x8x8xbf16>, vector<2x8x8xbf16>, vector<2x8x8xf32> -> vector<2x8x8xf32>
    "tpu.trace_stop"() : () -> ()
    %cst_22 = arith.constant 0.353553385 : f32
    %51 = vector.broadcast %cst_22 : f32 to vector<2x8x8xf32>
    %52 = arith.mulf %50, %51 : vector<2x8x8xf32>
    %53 = arith.addf %52, %46 : vector<2x8x8xf32>
    %cst_23 = arith.constant dense<0xFF800000> : vector<2x8xf32>
    %54 = vector.multi_reduction <maximumf>, %53, %cst_23 [2] : vector<2x8x8xf32> to vector<2x8xf32>
    %55 = vector.shape_cast %54 : vector<2x8xf32> to vector<2x8x1xf32>
    %56 = vector.broadcast %55 : vector<2x8x1xf32> to vector<2x8x8xf32>
    %57 = arith.subf %53, %56 : vector<2x8x8xf32>
    %58 = math.exp %57 : vector<2x8x8xf32>
    %cst_24 = arith.constant dense<0.000000e+00> : vector<2x8xf32>
    %59 = vector.multi_reduction <add>, %58, %cst_24 [2] : vector<2x8x8xf32> to vector<2x8xf32>
    %60 = vector.shape_cast %59 : vector<2x8xf32> to vector<2x8x1xf32>
    %61 = tpu.reciprocal %60 {approx = true} : vector<2x8x1xf32> -> vector<2x8x1xf32>
    %62 = vector.broadcast %61 : vector<2x8x1xf32> to vector<2x8x8xf32>
    %63 = arith.mulf %58, %62 : vector<2x8x8xf32>
    %64 = arith.truncf %63 : vector<2x8x8xf32> to vector<2x8x8xbf16>
    "tpu.trace_start"() <{level = 10 : i32, message = "bqk,bkd->bqd"}> : () -> ()
    %cst_25 = arith.constant dense<0.000000e+00> : vector<2x8x8xf32>
    %65 = tpu.matmul %64, %49, %cst_25 {dimension_numbers = #tpu.dot_dimension_numbers<[2], [1], [1], [2], [0, 0, 0, 1, 1, 2], [0], [0]>} : vector<2x8x8xbf16>, vector<2x8x8xbf16>, vector<2x8x8xf32> -> vector<2x8x8xf32>
    "tpu.trace_stop"() : () -> ()
    %66 = vector.extract_strided_slice %39 {offsets = [0, 0, 8], sizes = [2, 8, 8], strides = [1, 1, 1]} : vector<2x8x144xbf16> to vector<2x8x8xbf16>
    %67 = vector.extract_strided_slice %39 {offsets = [0, 0, 56], sizes = [2, 8, 8], strides = [1, 1, 1]} : vector<2x8x144xbf16> to vector<2x8x8xbf16>
    %68 = vector.extract_strided_slice %39 {offsets = [0, 0, 104], sizes = [2, 8, 8], strides = [1, 1, 1]} : vector<2x8x144xbf16> to vector<2x8x8xbf16>
    "tpu.trace_start"() <{level = 10 : i32, message = "bqd,bkd->bqk"}> : () -> ()
    %cst_26 = arith.constant dense<0.000000e+00> : vector<2x8x8xf32>
    %69 = tpu.matmul %66, %67, %cst_26 {dimension_numbers = #tpu.dot_dimension_numbers<[2], [2], [1], [1], [0, 0, 0, 1, 1, 1], [0], [0]>} : vector<2x8x8xbf16>, vector<2x8x8xbf16>, vector<2x8x8xf32> -> vector<2x8x8xf32>
    "tpu.trace_stop"() : () -> ()
    %cst_27 = arith.constant 0.353553385 : f32
    %70 = vector.broadcast %cst_27 : f32 to vector<2x8x8xf32>
    %71 = arith.mulf %69, %70 : vector<2x8x8xf32>
    %72 = arith.addf %71, %46 : vector<2x8x8xf32>
    %cst_28 = arith.constant dense<0xFF800000> : vector<2x8xf32>
    %73 = vector.multi_reduction <maximumf>, %72, %cst_28 [2] : vector<2x8x8xf32> to vector<2x8xf32>
    %74 = vector.shape_cast %73 : vector<2x8xf32> to vector<2x8x1xf32>
    %75 = vector.broadcast %74 : vector<2x8x1xf32> to vector<2x8x8xf32>
    %76 = arith.subf %72, %75 : vector<2x8x8xf32>
    %77 = math.exp %76 : vector<2x8x8xf32>
    %cst_29 = arith.constant dense<0.000000e+00> : vector<2x8xf32>
    %78 = vector.multi_reduction <add>, %77, %cst_29 [2] : vector<2x8x8xf32> to vector<2x8xf32>
    %79 = vector.shape_cast %78 : vector<2x8xf32> to vector<2x8x1xf32>
    %80 = tpu.reciprocal %79 {approx = true} : vector<2x8x1xf32> -> vector<2x8x1xf32>
    %81 = vector.broadcast %80 : vector<2x8x1xf32> to vector<2x8x8xf32>
    %82 = arith.mulf %77, %81 : vector<2x8x8xf32>
    %83 = arith.truncf %82 : vector<2x8x8xf32> to vector<2x8x8xbf16>
    "tpu.trace_start"() <{level = 10 : i32, message = "bqk,bkd->bqd"}> : () -> ()
    %cst_30 = arith.constant dense<0.000000e+00> : vector<2x8x8xf32>
    %84 = tpu.matmul %83, %68, %cst_30 {dimension_numbers = #tpu.dot_dimension_numbers<[2], [1], [1], [2], [0, 0, 0, 1, 1, 2], [0], [0]>} : vector<2x8x8xbf16>, vector<2x8x8xbf16>, vector<2x8x8xf32> -> vector<2x8x8xf32>
    "tpu.trace_stop"() : () -> ()
    %85 = vector.extract_strided_slice %39 {offsets = [0, 0, 16], sizes = [2, 8, 8], strides = [1, 1, 1]} : vector<2x8x144xbf16> to vector<2x8x8xbf16>
    %86 = vector.extract_strided_slice %39 {offsets = [0, 0, 64], sizes = [2, 8, 8], strides = [1, 1, 1]} : vector<2x8x144xbf16> to vector<2x8x8xbf16>
    %87 = vector.extract_strided_slice %39 {offsets = [0, 0, 112], sizes = [2, 8, 8], strides = [1, 1, 1]} : vector<2x8x144xbf16> to vector<2x8x8xbf16>
    "tpu.trace_start"() <{level = 10 : i32, message = "bqd,bkd->bqk"}> : () -> ()
    %cst_31 = arith.constant dense<0.000000e+00> : vector<2x8x8xf32>
    %88 = tpu.matmul %85, %86, %cst_31 {dimension_numbers = #tpu.dot_dimension_numbers<[2], [2], [1], [1], [0, 0, 0, 1, 1, 1], [0], [0]>} : vector<2x8x8xbf16>, vector<2x8x8xbf16>, vector<2x8x8xf32> -> vector<2x8x8xf32>
    "tpu.trace_stop"() : () -> ()
    %cst_32 = arith.constant 0.353553385 : f32
    %89 = vector.broadcast %cst_32 : f32 to vector<2x8x8xf32>
    %90 = arith.mulf %88, %89 : vector<2x8x8xf32>
    %91 = arith.addf %90, %46 : vector<2x8x8xf32>
    %cst_33 = arith.constant dense<0xFF800000> : vector<2x8xf32>
    %92 = vector.multi_reduction <maximumf>, %91, %cst_33 [2] : vector<2x8x8xf32> to vector<2x8xf32>
    %93 = vector.shape_cast %92 : vector<2x8xf32> to vector<2x8x1xf32>
    %94 = vector.broadcast %93 : vector<2x8x1xf32> to vector<2x8x8xf32>
    %95 = arith.subf %91, %94 : vector<2x8x8xf32>
    %96 = math.exp %95 : vector<2x8x8xf32>
    %cst_34 = arith.constant dense<0.000000e+00> : vector<2x8xf32>
    %97 = vector.multi_reduction <add>, %96, %cst_34 [2] : vector<2x8x8xf32> to vector<2x8xf32>
    %98 = vector.shape_cast %97 : vector<2x8xf32> to vector<2x8x1xf32>
    %99 = tpu.reciprocal %98 {approx = true} : vector<2x8x1xf32> -> vector<2x8x1xf32>
    %100 = vector.broadcast %99 : vector<2x8x1xf32> to vector<2x8x8xf32>
    %101 = arith.mulf %96, %100 : vector<2x8x8xf32>
    %102 = arith.truncf %101 : vector<2x8x8xf32> to vector<2x8x8xbf16>
    "tpu.trace_start"() <{level = 10 : i32, message = "bqk,bkd->bqd"}> : () -> ()
    %cst_35 = arith.constant dense<0.000000e+00> : vector<2x8x8xf32>
    %103 = tpu.matmul %102, %87, %cst_35 {dimension_numbers = #tpu.dot_dimension_numbers<[2], [1], [1], [2], [0, 0, 0, 1, 1, 2], [0], [0]>} : vector<2x8x8xbf16>, vector<2x8x8xbf16>, vector<2x8x8xf32> -> vector<2x8x8xf32>
    "tpu.trace_stop"() : () -> ()
    %104 = vector.extract_strided_slice %39 {offsets = [0, 0, 24], sizes = [2, 8, 8], strides = [1, 1, 1]} : vector<2x8x144xbf16> to vector<2x8x8xbf16>
    %105 = vector.extract_strided_slice %39 {offsets = [0, 0, 72], sizes = [2, 8, 8], strides = [1, 1, 1]} : vector<2x8x144xbf16> to vector<2x8x8xbf16>
    %106 = vector.extract_strided_slice %39 {offsets = [0, 0, 120], sizes = [2, 8, 8], strides = [1, 1, 1]} : vector<2x8x144xbf16> to vector<2x8x8xbf16>
    "tpu.trace_start"() <{level = 10 : i32, message = "bqd,bkd->bqk"}> : () -> ()
    %cst_36 = arith.constant dense<0.000000e+00> : vector<2x8x8xf32>
    %107 = tpu.matmul %104, %105, %cst_36 {dimension_numbers = #tpu.dot_dimension_numbers<[2], [2], [1], [1], [0, 0, 0, 1, 1, 1], [0], [0]>} : vector<2x8x8xbf16>, vector<2x8x8xbf16>, vector<2x8x8xf32> -> vector<2x8x8xf32>
    "tpu.trace_stop"() : () -> ()
    %cst_37 = arith.constant 0.353553385 : f32
    %108 = vector.broadcast %cst_37 : f32 to vector<2x8x8xf32>
    %109 = arith.mulf %107, %108 : vector<2x8x8xf32>
    %110 = arith.addf %109, %46 : vector<2x8x8xf32>
    %cst_38 = arith.constant dense<0xFF800000> : vector<2x8xf32>
    %111 = vector.multi_reduction <maximumf>, %110, %cst_38 [2] : vector<2x8x8xf32> to vector<2x8xf32>
    %112 = vector.shape_cast %111 : vector<2x8xf32> to vector<2x8x1xf32>
    %113 = vector.broadcast %112 : vector<2x8x1xf32> to vector<2x8x8xf32>
    %114 = arith.subf %110, %113 : vector<2x8x8xf32>
    %115 = math.exp %114 : vector<2x8x8xf32>
    %cst_39 = arith.constant dense<0.000000e+00> : vector<2x8xf32>
    %116 = vector.multi_reduction <add>, %115, %cst_39 [2] : vector<2x8x8xf32> to vector<2x8xf32>
    %117 = vector.shape_cast %116 : vector<2x8xf32> to vector<2x8x1xf32>
    %118 = tpu.reciprocal %117 {approx = true} : vector<2x8x1xf32> -> vector<2x8x1xf32>
    %119 = vector.broadcast %118 : vector<2x8x1xf32> to vector<2x8x8xf32>
    %120 = arith.mulf %115, %119 : vector<2x8x8xf32>
    %121 = arith.truncf %120 : vector<2x8x8xf32> to vector<2x8x8xbf16>
    "tpu.trace_start"() <{level = 10 : i32, message = "bqk,bkd->bqd"}> : () -> ()
    %cst_40 = arith.constant dense<0.000000e+00> : vector<2x8x8xf32>
    %122 = tpu.matmul %121, %106, %cst_40 {dimension_numbers = #tpu.dot_dimension_numbers<[2], [1], [1], [2], [0, 0, 0, 1, 1, 2], [0], [0]>} : vector<2x8x8xbf16>, vector<2x8x8xbf16>, vector<2x8x8xf32> -> vector<2x8x8xf32>
    "tpu.trace_stop"() : () -> ()
    %123 = vector.extract_strided_slice %39 {offsets = [0, 0, 32], sizes = [2, 8, 8], strides = [1, 1, 1]} : vector<2x8x144xbf16> to vector<2x8x8xbf16>
    %124 = vector.extract_strided_slice %39 {offsets = [0, 0, 80], sizes = [2, 8, 8], strides = [1, 1, 1]} : vector<2x8x144xbf16> to vector<2x8x8xbf16>
    %125 = vector.extract_strided_slice %39 {offsets = [0, 0, 128], sizes = [2, 8, 8], strides = [1, 1, 1]} : vector<2x8x144xbf16> to vector<2x8x8xbf16>
    "tpu.trace_start"() <{level = 10 : i32, message = "bqd,bkd->bqk"}> : () -> ()
    %cst_41 = arith.constant dense<0.000000e+00> : vector<2x8x8xf32>
    %126 = tpu.matmul %123, %124, %cst_41 {dimension_numbers = #tpu.dot_dimension_numbers<[2], [2], [1], [1], [0, 0, 0, 1, 1, 1], [0], [0]>} : vector<2x8x8xbf16>, vector<2x8x8xbf16>, vector<2x8x8xf32> -> vector<2x8x8xf32>
    "tpu.trace_stop"() : () -> ()
    %cst_42 = arith.constant 0.353553385 : f32
    %127 = vector.broadcast %cst_42 : f32 to vector<2x8x8xf32>
    %128 = arith.mulf %126, %127 : vector<2x8x8xf32>
    %129 = arith.addf %128, %46 : vector<2x8x8xf32>
    %cst_43 = arith.constant dense<0xFF800000> : vector<2x8xf32>
    %130 = vector.multi_reduction <maximumf>, %129, %cst_43 [2] : vector<2x8x8xf32> to vector<2x8xf32>
    %131 = vector.shape_cast %130 : vector<2x8xf32> to vector<2x8x1xf32>
    %132 = vector.broadcast %131 : vector<2x8x1xf32> to vector<2x8x8xf32>
    %133 = arith.subf %129, %132 : vector<2x8x8xf32>
    %134 = math.exp %133 : vector<2x8x8xf32>
    %cst_44 = arith.constant dense<0.000000e+00> : vector<2x8xf32>
    %135 = vector.multi_reduction <add>, %134, %cst_44 [2] : vector<2x8x8xf32> to vector<2x8xf32>
    %136 = vector.shape_cast %135 : vector<2x8xf32> to vector<2x8x1xf32>
    %137 = tpu.reciprocal %136 {approx = true} : vector<2x8x1xf32> -> vector<2x8x1xf32>
    %138 = vector.broadcast %137 : vector<2x8x1xf32> to vector<2x8x8xf32>
    %139 = arith.mulf %134, %138 : vector<2x8x8xf32>
    %140 = arith.truncf %139 : vector<2x8x8xf32> to vector<2x8x8xbf16>
    "tpu.trace_start"() <{level = 10 : i32, message = "bqk,bkd->bqd"}> : () -> ()
    %cst_45 = arith.constant dense<0.000000e+00> : vector<2x8x8xf32>
    %141 = tpu.matmul %140, %125, %cst_45 {dimension_numbers = #tpu.dot_dimension_numbers<[2], [1], [1], [2], [0, 0, 0, 1, 1, 2], [0], [0]>} : vector<2x8x8xbf16>, vector<2x8x8xbf16>, vector<2x8x8xf32> -> vector<2x8x8xf32>
    "tpu.trace_stop"() : () -> ()
    %142 = vector.extract_strided_slice %39 {offsets = [0, 0, 40], sizes = [2, 8, 8], strides = [1, 1, 1]} : vector<2x8x144xbf16> to vector<2x8x8xbf16>
    %143 = vector.extract_strided_slice %39 {offsets = [0, 0, 88], sizes = [2, 8, 8], strides = [1, 1, 1]} : vector<2x8x144xbf16> to vector<2x8x8xbf16>
    %144 = vector.extract_strided_slice %39 {offsets = [0, 0, 136], sizes = [2, 8, 8], strides = [1, 1, 1]} : vector<2x8x144xbf16> to vector<2x8x8xbf16>
    "tpu.trace_start"() <{level = 10 : i32, message = "bqd,bkd->bqk"}> : () -> ()
    %cst_46 = arith.constant dense<0.000000e+00> : vector<2x8x8xf32>
    %145 = tpu.matmul %142, %143, %cst_46 {dimension_numbers = #tpu.dot_dimension_numbers<[2], [2], [1], [1], [0, 0, 0, 1, 1, 1], [0], [0]>} : vector<2x8x8xbf16>, vector<2x8x8xbf16>, vector<2x8x8xf32> -> vector<2x8x8xf32>
    "tpu.trace_stop"() : () -> ()
    %cst_47 = arith.constant 0.353553385 : f32
    %146 = vector.broadcast %cst_47 : f32 to vector<2x8x8xf32>
    %147 = arith.mulf %145, %146 : vector<2x8x8xf32>
    %148 = arith.addf %147, %46 : vector<2x8x8xf32>
    %cst_48 = arith.constant dense<0xFF800000> : vector<2x8xf32>
    %149 = vector.multi_reduction <maximumf>, %148, %cst_48 [2] : vector<2x8x8xf32> to vector<2x8xf32>
    %150 = vector.shape_cast %149 : vector<2x8xf32> to vector<2x8x1xf32>
    %151 = vector.broadcast %150 : vector<2x8x1xf32> to vector<2x8x8xf32>
    %152 = arith.subf %148, %151 : vector<2x8x8xf32>
    %153 = math.exp %152 : vector<2x8x8xf32>
    %cst_49 = arith.constant dense<0.000000e+00> : vector<2x8xf32>
    %154 = vector.multi_reduction <add>, %153, %cst_49 [2] : vector<2x8x8xf32> to vector<2x8xf32>
    %155 = vector.shape_cast %154 : vector<2x8xf32> to vector<2x8x1xf32>
    %156 = tpu.reciprocal %155 {approx = true} : vector<2x8x1xf32> -> vector<2x8x1xf32>
    %157 = vector.broadcast %156 : vector<2x8x1xf32> to vector<2x8x8xf32>
    %158 = arith.mulf %153, %157 : vector<2x8x8xf32>
    %159 = arith.truncf %158 : vector<2x8x8xf32> to vector<2x8x8xbf16>
    "tpu.trace_start"() <{level = 10 : i32, message = "bqk,bkd->bqd"}> : () -> ()
    %cst_50 = arith.constant dense<0.000000e+00> : vector<2x8x8xf32>
    %160 = tpu.matmul %159, %144, %cst_50 {dimension_numbers = #tpu.dot_dimension_numbers<[2], [1], [1], [2], [0, 0, 0, 1, 1, 2], [0], [0]>} : vector<2x8x8xbf16>, vector<2x8x8xbf16>, vector<2x8x8xf32> -> vector<2x8x8xf32>
    "tpu.trace_stop"() : () -> ()
    %161 = tpu.concatenate %65, %84, %103, %122, %141, %160 in 2 : vector<2x8x8xf32>, vector<2x8x8xf32>, vector<2x8x8xf32>, vector<2x8x8xf32>, vector<2x8x8xf32>, vector<2x8x8xf32> -> vector<2x8x48xf32>
    %162 = vector.shape_cast %161 : vector<2x8x48xf32> to vector<16x48xf32>
    %163 = arith.truncf %162 : vector<16x48xf32> to vector<16x48xbf16>
    %c0_51 = arith.constant 0 : index
    %c0_52 = arith.constant 0 : index
    %164 = vector.load %arg8[%c0_51, %c0_52] : memref<48x48xbf16, #tpu.memory_space<vmem>>, vector<48x48xbf16>
    %cst_53 = arith.constant dense<0.000000e+00> : vector<16x48xf32>
    %165 = tpu.matmul %163, %164, %cst_53 {dimension_numbers = #tpu.dot_dimension_numbers<[1], [0], [0], [1], [0, 0, 1, 1], [], []>} : vector<16x48xbf16>, vector<48x48xbf16>, vector<16x48xf32> -> vector<16x48xf32>
    %166 = vector.extract_strided_slice %3 {offsets = [6, 0], sizes = [1, 48], strides = [1, 1]} : vector<8x48xf32> to vector<1x48xf32>
    %167 = vector.broadcast %166 : vector<1x48xf32> to vector<16x48xf32>
    %168 = arith.addf %165, %167 : vector<16x48xf32>
    %169 = arith.addf %31, %168 : vector<16x48xf32>
    %170 = vector.extract_strided_slice %3 {offsets = [2, 0], sizes = [1, 48], strides = [1, 1]} : vector<8x48xf32> to vector<1x48xf32>
    %171 = vector.extract_strided_slice %3 {offsets = [3, 0], sizes = [1, 48], strides = [1, 1]} : vector<8x48xf32> to vector<1x48xf32>
    %cst_54 = arith.constant dense<0.000000e+00> : vector<16xf32>
    %172 = vector.multi_reduction <add>, %169, %cst_54 [1] : vector<16x48xf32> to vector<16xf32>
    %173 = vector.shape_cast %172 : vector<16xf32> to vector<16x1xf32>
    %cst_55 = arith.constant 4.800000e+01 : f32
    %174 = vector.broadcast %cst_55 : f32 to vector<16x1xf32>
    %175 = arith.divf %173, %174 : vector<16x1xf32>
    %176 = vector.broadcast %175 : vector<16x1xf32> to vector<16x48xf32>
    %177 = arith.subf %169, %176 : vector<16x48xf32>
    %178 = arith.mulf %177, %177 : vector<16x48xf32>
    %cst_56 = arith.constant dense<0.000000e+00> : vector<16xf32>
    %179 = vector.multi_reduction <add>, %178, %cst_56 [1] : vector<16x48xf32> to vector<16xf32>
    %180 = vector.shape_cast %179 : vector<16xf32> to vector<16x1xf32>
    %cst_57 = arith.constant 4.800000e+01 : f32
    %181 = vector.broadcast %cst_57 : f32 to vector<16x1xf32>
    %182 = arith.divf %180, %181 : vector<16x1xf32>
    %183 = vector.broadcast %175 : vector<16x1xf32> to vector<16x48xf32>
    %184 = arith.subf %169, %183 : vector<16x48xf32>
    %cst_58 = arith.constant 9.99999974E-6 : f32
    %185 = vector.broadcast %cst_58 : f32 to vector<16x1xf32>
    %186 = arith.addf %182, %185 : vector<16x1xf32>
    %187 = math.rsqrt %186 : vector<16x1xf32>
    %188 = vector.broadcast %187 : vector<16x1xf32> to vector<16x48xf32>
    %189 = arith.mulf %184, %188 : vector<16x48xf32>
    %190 = vector.broadcast %170 : vector<1x48xf32> to vector<16x48xf32>
    %191 = arith.mulf %189, %190 : vector<16x48xf32>
    %192 = vector.broadcast %171 : vector<1x48xf32> to vector<16x48xf32>
    %193 = arith.addf %191, %192 : vector<16x48xf32>
    %194 = arith.truncf %193 : vector<16x48xf32> to vector<16x48xbf16>
    %c0_59 = arith.constant 0 : index
    %c0_60 = arith.constant 0 : index
    %195 = vector.load %arg9[%c0_59, %c0_60] : memref<48x128xbf16, #tpu.memory_space<vmem>>, vector<48x128xbf16>
    %cst_61 = arith.constant dense<0.000000e+00> : vector<16x128xf32>
    %196 = tpu.matmul %194, %195, %cst_61 {dimension_numbers = #tpu.dot_dimension_numbers<[1], [0], [0], [1], [0, 0, 1, 1], [], []>} : vector<16x48xbf16>, vector<48x128xbf16>, vector<16x128xf32> -> vector<16x128xf32>
    %c0_62 = arith.constant 0 : index
    %c0_63 = arith.constant 0 : index
    %197 = vector.load %arg10[%c0_62, %c0_63] : memref<1x128xf32, #tpu.memory_space<vmem>>, vector<1x128xf32>
    %198 = vector.broadcast %197 : vector<1x128xf32> to vector<16x128xf32>
    %199 = arith.addf %196, %198 : vector<16x128xf32>
    %cst_64 = arith.constant 0.000000e+00 : f32
    %200 = vector.broadcast %cst_64 : f32 to vector<16x128xf32>
    %201 = arith.maximumf %199, %200 : vector<16x128xf32>
    %202 = arith.truncf %201 : vector<16x128xf32> to vector<16x128xbf16>
    %c0_65 = arith.constant 0 : index
    %c0_66 = arith.constant 0 : index
    %203 = vector.load %arg11[%c0_65, %c0_66] : memref<128x48xbf16, #tpu.memory_space<vmem>>, vector<128x48xbf16>
    %cst_67 = arith.constant dense<0.000000e+00> : vector<16x48xf32>
    %204 = tpu.matmul %202, %203, %cst_67 {dimension_numbers = #tpu.dot_dimension_numbers<[1], [0], [0], [1], [0, 0, 1, 1], [], []>} : vector<16x128xbf16>, vector<128x48xbf16>, vector<16x48xf32> -> vector<16x48xf32>
    %205 = vector.extract_strided_slice %3 {offsets = [7, 0], sizes = [1, 48], strides = [1, 1]} : vector<8x48xf32> to vector<1x48xf32>
    %206 = vector.broadcast %205 : vector<1x48xf32> to vector<16x48xf32>
    %207 = arith.addf %204, %206 : vector<16x48xf32>
    %208 = arith.addf %193, %207 : vector<16x48xf32>
    %209 = vector.extract_strided_slice %3 {offsets = [4, 0], sizes = [1, 48], strides = [1, 1]} : vector<8x48xf32> to vector<1x48xf32>
    %210 = vector.extract_strided_slice %3 {offsets = [5, 0], sizes = [1, 48], strides = [1, 1]} : vector<8x48xf32> to vector<1x48xf32>
    %cst_68 = arith.constant dense<0.000000e+00> : vector<16xf32>
    %211 = vector.multi_reduction <add>, %208, %cst_68 [1] : vector<16x48xf32> to vector<16xf32>
    %212 = vector.shape_cast %211 : vector<16xf32> to vector<16x1xf32>
    %cst_69 = arith.constant 4.800000e+01 : f32
    %213 = vector.broadcast %cst_69 : f32 to vector<16x1xf32>
    %214 = arith.divf %212, %213 : vector<16x1xf32>
    %215 = vector.broadcast %214 : vector<16x1xf32> to vector<16x48xf32>
    %216 = arith.subf %208, %215 : vector<16x48xf32>
    %217 = arith.mulf %216, %216 : vector<16x48xf32>
    %cst_70 = arith.constant dense<0.000000e+00> : vector<16xf32>
    %218 = vector.multi_reduction <add>, %217, %cst_70 [1] : vector<16x48xf32> to vector<16xf32>
    %219 = vector.shape_cast %218 : vector<16xf32> to vector<16x1xf32>
    %cst_71 = arith.constant 4.800000e+01 : f32
    %220 = vector.broadcast %cst_71 : f32 to vector<16x1xf32>
    %221 = arith.divf %219, %220 : vector<16x1xf32>
    %222 = vector.broadcast %214 : vector<16x1xf32> to vector<16x48xf32>
    %223 = arith.subf %208, %222 : vector<16x48xf32>
    %cst_72 = arith.constant 9.99999974E-6 : f32
    %224 = vector.broadcast %cst_72 : f32 to vector<16x1xf32>
    %225 = arith.addf %221, %224 : vector<16x1xf32>
    %226 = math.rsqrt %225 : vector<16x1xf32>
    %227 = vector.broadcast %226 : vector<16x1xf32> to vector<16x48xf32>
    %228 = arith.mulf %223, %227 : vector<16x48xf32>
    %229 = vector.broadcast %209 : vector<1x48xf32> to vector<16x48xf32>
    %230 = arith.mulf %228, %229 : vector<16x48xf32>
    %231 = vector.broadcast %210 : vector<1x48xf32> to vector<16x48xf32>
    %232 = arith.addf %230, %231 : vector<16x48xf32>
    %c0_73 = arith.constant 0 : index
    %c0_74 = arith.constant 0 : index
    %c0_75 = arith.constant 0 : index
    %233 = vector.load %arg3[%c0_73, %c0_74, %c0_75] : memref<2x8x1xf32, #tpu.memory_space<vmem>>, vector<2x8x1xf32>
    %cst_76 = arith.constant 1.000000e+00 : f32
    %234 = vector.broadcast %cst_76 : f32 to vector<2x8x1xf32>
    %235 = arith.subf %234, %233 : vector<2x8x1xf32>
    %236 = vector.shape_cast %232 : vector<16x48xf32> to vector<2x8x48xf32>
    %237 = vector.broadcast %235 : vector<2x8x1xf32> to vector<2x8x48xf32>
    %238 = arith.mulf %236, %237 : vector<2x8x48xf32>
    %cst_77 = arith.constant dense<0.000000e+00> : vector<2x48xf32>
    %239 = vector.multi_reduction <add>, %238, %cst_77 [1] : vector<2x8x48xf32> to vector<2x48xf32>
    %cst_78 = arith.constant dense<0.000000e+00> : vector<2x1xf32>
    %240 = vector.multi_reduction <add>, %235, %cst_78 [1] : vector<2x8x1xf32> to vector<2x1xf32>
    %cst_79 = arith.constant 1.000000e+00 : f32
    %241 = vector.broadcast %cst_79 : f32 to vector<2x1xf32>
    %242 = arith.maximumf %240, %241 : vector<2x1xf32>
    %243 = vector.broadcast %242 : vector<2x1xf32> to vector<2x48xf32>
    %244 = arith.divf %239, %243 : vector<2x48xf32>
    %c0_80 = arith.constant 0 : index
    %c0_81 = arith.constant 0 : index
    %245 = vector.load %arg12[%c0_80, %c0_81] : memref<2x48xf32, #tpu.memory_space<vmem>>, vector<2x48xf32>
    tpu.vector_store %arg12[%c0_80, %c0_81], %244 {strides = array<i32>} : memref<2x48xf32, #tpu.memory_space<vmem>>, vector<2x48xf32>,
    return
  }
  func.func @transform_0(%arg0: i32) -> (i32, i32, i32) {
    %c0_i32 = arith.constant 0 : i32
    %c0_i32_0 = arith.constant 0 : i32
    %c0_i32_1 = arith.constant 0 : i32
    return %arg0, %c0_i32, %c0_i32_0 : i32, i32, i32
  }
  func.func @transform_1(%arg0: i32) -> (i32, i32, i32) {
    %c0_i32 = arith.constant 0 : i32
    %c0_i32_0 = arith.constant 0 : i32
    %c0_i32_1 = arith.constant 0 : i32
    return %arg0, %c0_i32, %c0_i32_0 : i32, i32, i32
  }
  func.func @transform_2(%arg0: i32) -> (i32, i32, i32) {
    %c0_i32 = arith.constant 0 : i32
    %c0_i32_0 = arith.constant 0 : i32
    %c0_i32_1 = arith.constant 0 : i32
    return %arg0, %c0_i32, %c0_i32_0 : i32, i32, i32
  }
  func.func @transform_3(%arg0: i32) -> (i32, i32) {
    %c0_i32 = arith.constant 0 : i32
    %c0_i32_0 = arith.constant 0 : i32
    %c0_i32_1 = arith.constant 0 : i32
    return %c0_i32, %c0_i32_0 : i32, i32
  }
  func.func @transform_4(%arg0: i32) -> (i32, i32) {
    %c0_i32 = arith.constant 0 : i32
    %c0_i32_0 = arith.constant 0 : i32
    %c0_i32_1 = arith.constant 0 : i32
    return %c0_i32, %c0_i32_0 : i32, i32
  }
  func.func @transform_5(%arg0: i32) -> (i32, i32) {
    %c0_i32 = arith.constant 0 : i32
    %c0_i32_0 = arith.constant 0 : i32
    %c0_i32_1 = arith.constant 0 : i32
    return %c0_i32, %c0_i32_0 : i32, i32
  }
  func.func @transform_6(%arg0: i32) -> (i32, i32) {
    %c0_i32 = arith.constant 0 : i32
    %c0_i32_0 = arith.constant 0 : i32
    %c0_i32_1 = arith.constant 0 : i32
    return %c0_i32, %c0_i32_0 : i32, i32
  }
  func.func @transform_7(%arg0: i32) -> (i32, i32) {
    %c0_i32 = arith.constant 0 : i32
    %c0_i32_0 = arith.constant 0 : i32
    %c0_i32_1 = arith.constant 0 : i32
    return %c0_i32, %c0_i32_0 : i32, i32
  }
  func.func @transform_8(%arg0: i32) -> (i32, i32) {
    %c0_i32 = arith.constant 0 : i32
    %c0_i32_0 = arith.constant 0 : i32
    %c0_i32_1 = arith.constant 0 : i32
    return %c0_i32, %c0_i32_0 : i32, i32
  }
  func.func @transform_9(%arg0: i32) -> (i32, i32) {
    %c0_i32 = arith.constant 0 : i32
    %c0_i32_0 = arith.constant 0 : i32
    %c0_i32_1 = arith.constant 0 : i32
    return %c0_i32, %c0_i32_0 : i32, i32
  }
  func.func @transform_10(%arg0: i32) -> (i32, i32) {
    %c0_i32 = arith.constant 0 : i32
    %c0_i32_0 = arith.constant 0 : i32
    %c0_i32_1 = arith.constant 0 : i32
    return %c0_i32, %c0_i32_0 : i32, i32
  }
  func.func @transform_11(%arg0: i32) -> (i32, i32) {
    %c0_i32 = arith.constant 0 : i32
    %c0_i32_0 = arith.constant 0 : i32
    return %arg0, %c0_i32 : i32, i32
  }
}

</mosaic_0001>

<llo_original>
// kernel: transformer_layer.1
$region0: #{transformer_layer.1}
  #allocation0 [shape = 'u32[]', space=smem, size = 0x4, offset = 0x4, fixed_abs, tag = 'smem constant byte address 0x4 - core index']
  #allocation1 [shape = 'u32[144,128]{1,0:T(1,128)}', space=vmem, size = 0x12000, scoped, tag = 'internal scratch']
  %s0 = inlined_call_operand.vmem [shape: f32[2,8,48], index: 0, kind: input, shape index: {}]
  %s1 = inlined_call_operand.vmem [shape: f32[2,1,8], index: 1, kind: input, shape index: {}]
  %s2 = inlined_call_operand.vmem [shape: f32[2,8,1], index: 2, kind: input, shape index: {}]
  %s3 = inlined_call_operand.vmem [shape: f32[8,48], index: 3, kind: input, shape index: {}]
  %s4 = inlined_call_operand.vmem [shape: f32[8,48], index: 4, kind: input, shape index: {}]
  %s5 = inlined_call_operand.vmem [shape: bf16[48,144], index: 5, kind: input, shape index: {}]
  %s6 = inlined_call_operand.vmem [shape: f32[1,144], index: 6, kind: input, shape index: {}]
  %s7 = inlined_call_operand.vmem [shape: bf16[48,48], index: 7, kind: input, shape index: {}]
  %s8 = inlined_call_operand.vmem [shape: bf16[48,128], index: 8, kind: input, shape index: {}]
  %s9 = inlined_call_operand.vmem [shape: f32[1,128], index: 9, kind: input, shape index: {}]
  %s10 = inlined_call_operand.vmem [shape: bf16[128,48], index: 10, kind: input, shape index: {}]
  %s11 = inlined_call_operand.hbm [shape: f32[2,48], index: 11, kind: output, shape index: {}]
  %s12 = sld [smem:[#allocation0]]
  $region54: #{transformer_layer.1} parent=0
    _
  %s14 = ssub.s32 1, %s12
  %s15 = scalar_select 0, %s14, %s12
  $region1: #{transformer_layer.1} parent=0
    #allocation2 [shape = 'u8[1024]{0}', space=vmem, size = 0x400, scoped, tag = 'output window, operand 0, single buffered']
    #allocation3 [shape = 's32[1]{0}', space=sflag, size = 0x4, scoped, tag = 'scoped memory for transformer_layer.1']
    %16 = vsyncpa [#allocation3], 0
    // Predicated region
    $region2: #{transformer_layer.1} parent=1 // pred_check
      _
    $region3: #{transformer_layer.1} parent=1 // pred_check_branch
      %18 = sbr.rel (0) target = $region5
    $region4: #{transformer_layer.1} parent=1 // pred_region
      _
    $region5: #{transformer_layer.1} parent=1 // pred_fallthru
      _
    // Predicated region
    $region6: #{transformer_layer.1} parent=1 // pred_check
      _
    $region7: #{transformer_layer.1} parent=1 // pred_check_branch
      %20 = sbr.rel (0) target = $region9
    $region8: #{transformer_layer.1} parent=1 // pred_region
      _
    $region9: #{transformer_layer.1} parent=1 // pred_fallthru
      _
    // Predicated region
    $region10: #{transformer_layer.1} parent=1 // pred_check
      _
    $region11: #{transformer_layer.1} parent=1 // pred_check_branch
      %22 = sbr.rel (0) target = $region13
    $region12: #{transformer_layer.1} parent=1 // pred_region
      _
    $region13: #{transformer_layer.1} parent=1 // pred_fallthru
      _
    // Predicated region
    $region14: #{transformer_layer.1} parent=1 // pred_check
      _
    $region15: #{transformer_layer.1} parent=1 // pred_check_branch
      %24 = sbr.rel (0) target = $region17
    $region16: #{transformer_layer.1} parent=1 // pred_region
      _
    $region17: #{transformer_layer.1} parent=1 // pred_fallthru
      _
    // Predicated region
    $region18: #{transformer_layer.1} parent=1 // pred_check
      _
    $region19: #{transformer_layer.1} parent=1 // pred_check_branch
      %26 = sbr.rel (0) target = $region21
    $region20: #{transformer_layer.1} parent=1 // pred_region
      _
    $region21: #{transformer_layer.1} parent=1 // pred_fallthru
      _
    // Predicated region
    $region22: #{transformer_layer.1} parent=1 // pred_check
      _
    $region23: #{transformer_layer.1} parent=1 // pred_check_branch
      %28 = sbr.rel (0) target = $region25
    $region24: #{transformer_layer.1} parent=1 // pred_region
      _
    $region25: #{transformer_layer.1} parent=1 // pred_fallthru
      _
    // Predicated region
    $region26: #{transformer_layer.1} parent=1 // pred_check
      _
    $region27: #{transformer_layer.1} parent=1 // pred_check_branch
      %30 = sbr.rel (0) target = $region29
    $region28: #{transformer_layer.1} parent=1 // pred_region
      _
    $region29: #{transformer_layer.1} parent=1 // pred_fallthru
      _
    // Predicated region
    $region30: #{transformer_layer.1} parent=1 // pred_check
      _
    $region31: #{transformer_layer.1} parent=1 // pred_check_branch
      %32 = sbr.rel (0) target = $region33
    $region32: #{transformer_layer.1} parent=1 // pred_region
      _
    $region33: #{transformer_layer.1} parent=1 // pred_fallthru
      _
    // Predicated region
    $region34: #{transformer_layer.1} parent=1 // pred_check
      _
    $region35: #{transformer_layer.1} parent=1 // pred_check_branch
      %34 = sbr.rel (0) target = $region37
    $region36: #{transformer_layer.1} parent=1 // pred_region
      _
    $region37: #{transformer_layer.1} parent=1 // pred_fallthru
      _
    // Predicated region
    $region38: #{transformer_layer.1} parent=1 // pred_check
      _
    $region39: #{transformer_layer.1} parent=1 // pred_check_branch
      %36 = sbr.rel (0) target = $region41
    $region40: #{transformer_layer.1} parent=1 // pred_region
      _
    $region41: #{transformer_layer.1} parent=1 // pred_fallthru
      _
    // Predicated region
    $region42: #{transformer_layer.1} parent=1 // pred_check
      _
    $region43: #{transformer_layer.1} parent=1 // pred_check_branch
      %38 = sbr.rel (0) target = $region45
    $region44: #{transformer_layer.1} parent=1 // pred_region
      _
    $region45: #{transformer_layer.1} parent=1 // pred_fallthru
      _
    %v40 = vld [vmem:[%s0] sm:$0xff]
    %v41 = vld [vmem:[%s0 + $0x8] sm:$0xff]
    %v42 = vld [vmem:[%s1] sm:$0x1]
    %v43 = vld [vmem:[%s1 + $0x1] sm:$0x1]
    %v44 = vld [vmem:[%s3] sm:$0xff]
    %v45 = vld [vmem:[%s4] sm:$0xff]
    %v46 = vadd.f32 %v40, %v44
    %v47 = vadd.f32 %v41, %v44
    %vm48 = vcmask 392192
    %v49 = vsel %vm48, %v46, 0.0
    %50 = vadd.xlane.f32.xlu0 %v49
    %v51 = vpop.xlane.xlu0 %50
    %v52 = vsel %vm48, %v47, 0.0
    %53 = vadd.xlane.f32.xlu0 %v52
    %v54 = vpop.xlane.xlu0 %53
    %v55 = vrcp.pop 48.0
    %v56 = vmul.f32 %v51, %v55
    %v57 = vmul.f32 %v54, %v55
    %v58 = vsub.f32 %v46, %v56
    %v59 = vsub.f32 %v47, %v57
    %v60 = vmul.f32 %v58, %v58
    %v61 = vmul.f32 %v59, %v59
    %v62 = vsel %vm48, %v60, 0.0
    %63 = vadd.xlane.f32.xlu0 %v62
    %v64 = vpop.xlane.xlu0 %63
    %v65 = vsel %vm48, %v61, 0.0
    %66 = vadd.xlane.f32.xlu0 %v65
    %v67 = vpop.xlane.xlu0 %66
    %v68 = vmul.f32 %v64, %v55
    %v69 = vmul.f32 %v67, %v55
    %v70 = vadd.f32 %v68, 1e-05
    %v71 = vadd.f32 %v69, 1e-05
    %v72 = vrsqrt.pop %v70
    %v73 = vrsqrt.pop %v71
    %v74 = vmul.f32 %v58, %v72
    %v75 = vmul.f32 %v59, %v73
    %v76 = vlaneseq
    %v77 = vshrl.u32 %v76, 7
    %v78 = vsub.s32 0, %v77
    %v79 = vrot.slane %v45, %v78
    %v80 = vmul.f32 %v74, %v79
    %v81 = vmul.f32 %v75, %v79
    %v82 = vlaneseq
    %v83 = vshrl.u32 %v82, 7
    %v84 = vsub.s32 1, %v83
    %v85 = vrot.slane %v45, %v84
    %v86 = vadd.f32 %v80, %v85
    %v87 = vadd.f32 %v81, %v85
    %v88 = vpack.c.bf16 %v87, %v86
    %v89 = vld [vmem:[%s5] sm:$0xff]
    %v90 = vld [vmem:[%s5 + $0x8] sm:$0xff]
    %v91 = vld [vmem:[%s5 + $0x10] sm:$0xff]
    %v92 = vld [vmem:[%s5 + $0x18] sm:$0xff]
    %v93 = vld [vmem:[%s5 + $0x20] sm:$0xff]
    %v94 = vld [vmem:[%s5 + $0x28] sm:$0xff]
    %v95 = vld [vmem:[%s6] sm:$0x3]
    %v97 = vlaneseq
    %v98 = vshrl.u32 %v97, 7
    %v99 = vsub.s32 0, %v98
    %v100 = vrot.slane %v95, %v99
    %v101 = vlaneseq
    %v102 = vshrl.u32 %v101, 7
    %v103 = vsub.s32 1, %v102
    %v104 = vrot.slane %v95, %v103
    %v113 = vunpack.c.l.b16 %v89
    %v114 = vunpack.c.h.b16 %v89
    %v115 = vunpack.c.l.b16 %v90
    %v116 = vunpack.c.h.b16 %v90
    %v117 = vunpack.c.l.b16 %v91
    %v118 = vunpack.c.h.b16 %v91
    %v119 = vunpack.c.l.b16 %v92
    %v120 = vunpack.c.h.b16 %v92
    %v121 = vunpack.c.l.b16 %v93
    %v122 = vunpack.c.h.b16 %v93
    %v123 = vunpack.c.l.b16 %v94
    %v124 = vunpack.c.h.b16 %v94
    %v125 = vpack.c.b16 %v115, %v113
    %v126 = vpack.c.b16 %v116, %v114
    %v127 = vpack.c.b16 %v119, %v117
    %v128 = vpack.c.b16 %v120, %v118
    %v129 = vpack.c.b16 %v123, %v121
    %v130 = vpack.c.b16 %v124, %v122
    %v138 = vsel %vm48, %v88, 0
    %140 = vmatprep.subr.bf16.mxu0 0
    %141 = vmatpush1.bf16.msra.mxu0 0
    %142 = vmatprep.subr.bf16.mxu0 0
    %143 = vmatpush1.bf16.msra.mxu0 0
    %144 = vmatprep.subr.bf16.mxu0 0
    %145 = vmatpush1.bf16.msra.mxu0 0
    %146 = vmatprep.subr.bf16.mxu0 0
    %147 = vmatpush1.bf16.msra.mxu0 0
    %148 = vmatprep.subr.bf16.mxu0 0
    %149 = vmatpush1.bf16.msra.mxu0 0
    %150 = vmatprep.subr.bf16.mxu0 %v130
    %151 = vmatpush1.bf16.msra.mxu0 %v129
    %152 = vmatprep.subr.bf16.mxu0 %v128
    %153 = vmatpush1.bf16.msra.mxu0 %v127
    %154 = vmatprep.subr.bf16.mxu0 %v126
    %155 = vmatpush1.bf16.msra.mxu0 %v125
    %156 = vmatprep.subr.bf16.mxu0 0
    %157 = vmatpush2.bf16.msra.mxu0 0
    %158 = vmatprep.subr.bf16.mxu0 0
    %159 = vmatpush2.bf16.msra.mxu0 0
    %160 = vmatprep.subr.bf16.mxu0 0
    %161 = vmatpush2.bf16.msra.mxu0 0
    %162 = vmatprep.subr.bf16.mxu0 0
    %163 = vmatpush2.bf16.msra.mxu0 0
    %164 = vmatprep.subr.bf16.mxu0 0
    %165 = vmatpush2.bf16.msra.mxu0 0
    %166 = vmatprep.subr.bf16.mxu0 0
    %167 = vmatpush2.bf16.msra.mxu0 0
    %168 = vmatprep.subr.bf16.mxu0 0
    %169 = vmatpush2.bf16.msra.mxu0 0
    %170 = vmatprep.subr.bf16.mxu0 0
    %171 = vmatpush2.bf16.msra.mxu0 0
    %172 = vmatprep.mubr.bf16.mxu0 0
    %173 = vmatmul.mubr.bf16.gmra.mxu0 %v138
    %v174 = vpop.f32.mrf.mxu0
    %v175 = vadd.f32 %v100, %v174
    %v176 = vpop.f32.mrf.mxu0
    %v177 = vadd.f32 %v104, %v176
    %v178 = vpop.f32.mrf.mxu0
    %v179 = vadd.f32 %v100, %v178
    %v180 = vpop.f32.mrf.mxu0
    %v181 = vadd.f32 %v104, %v180
    %182 = vdwg.mxu0
    %v183 = vpack.c.bf16 %v179, %v175
    %v184 = vpack.c.bf16 %v181, %v177
    %v187 = vunpack.c.l.b16 %v183
    %v188 = vunpack.c.l.b16 %v184
    %v189 = vunpack.c.h.b16 %v183
    %v190 = vunpack.c.h.b16 %v184
    %v191 = vpack.c.b16 %v188, %v187
    %v192 = vpack.c.b16 %v190, %v189
    %vm193 = vcmp.gt.f32.partialorder %v42, 0.0
    %vm194 = vcmp.gt.f32.partialorder %v43, 0.0
    %v195 = vsel %vm193, 0.0, -1e+30
    %v196 = vsel %vm194, 0.0, -1e+30
    %v199 = vlaneseq
    %v200 = vshrl.u32 %v199, 7
    %v201 = vsub.s32 0, %v200
    %v202 = vrot.slane %v195, %v201
    %v203 = vlaneseq
    %v204 = vshrl.u32 %v203, 7
    %v205 = vsub.s32 0, %v204
    %v206 = vrot.slane %v196, %v205
    %v209 = vpack.c.b16 %v187, %v187
    %210 = vrot.lane.b32.xlu0 %v209, 80
    %v211 = vpop.permute.xlu0 %210
    %vm212 = vcmask 64512
    %v214 = vsel %vm212, %v191, 0
    %v217 = vsel %vm212, %v211, 0
    %219 = vmatprep.subr.bf16.mxu0 0
    %220 = vmatpush1.bf16.xpose.msra.mxu0 0
    %221 = vmatprep.subr.bf16.mxu0 0
    %222 = vmatpush1.bf16.xpose.msra.mxu0 0
    %223 = vmatprep.subr.bf16.mxu0 0
    %224 = vmatpush1.bf16.xpose.msra.mxu0 0
    %225 = vmatprep.subr.bf16.mxu0 0
    %226 = vmatpush1.bf16.xpose.msra.mxu0 0
    %227 = vmatprep.subr.bf16.mxu0 0
    %228 = vmatpush1.bf16.xpose.msra.mxu0 0
    %229 = vmatprep.subr.bf16.mxu0 0
    %230 = vmatpush1.bf16.xpose.msra.mxu0 0
    %231 = vmatprep.subr.bf16.mxu0 0
    %232 = vmatpush1.bf16.xpose.msra.mxu0 0
    %233 = vmatprep.subr.bf16.mxu0 0
    %234 = vmatpush1.bf16.xpose.msra.mxu0 %v217
    %235 = vmatprep.subr.bf16.mxu0 0
    %236 = vmatpush2.bf16.xpose.msra.mxu0 0
    %237 = vmatprep.subr.bf16.mxu0 0
    %238 = vmatpush2.bf16.xpose.msra.mxu0 0
    %239 = vmatprep.subr.bf16.mxu0 0
    %240 = vmatpush2.bf16.xpose.msra.mxu0 0
    %241 = vmatprep.subr.bf16.mxu0 0
    %242 = vmatpush2.bf16.xpose.msra.mxu0 0
    %243 = vmatprep.subr.bf16.mxu0 0
    %244 = vmatpush2.bf16.xpose.msra.mxu0 0
    %245 = vmatprep.subr.bf16.mxu0 0
    %246 = vmatpush2.bf16.xpose.msra.mxu0 0
    %247 = vmatprep.subr.bf16.mxu0 0
    %248 = vmatpush2.bf16.xpose.msra.mxu0 0
    %249 = vmatprep.subr.bf16.mxu0 0
    %250 = vmatpush2.bf16.xpose.msra.mxu0 0
    %251 = vmatprep.mubr.bf16.mxu0 0
    %252 = vmatmul.mubr.bf16.gmra.mxu0 %v214
    %v253 = vpop.f32.mrf.mxu0
    %v254 = vadd.f32 0.0, %v253
    %v255 = vpop.f32.mrf.mxu0
    %v256 = vpop.f32.mrf.mxu0
    %v257 = vpop.f32.mrf.mxu0
    %258 = vdwg.mxu0
    %v259 = vpack.c.b16 %v189, %v189
    %260 = vrot.lane.b32.xlu0 %v259, 80
    %v261 = vpop.permute.xlu0 %260
    %v263 = vsel %vm212, %v192, 0
    %v266 = vsel %vm212, %v261, 0
    %268 = vmatprep.subr.bf16.mxu0 0
    %269 = vmatpush1.bf16.xpose.msra.mxu0 0
    %270 = vmatprep.subr.bf16.mxu0 0
    %271 = vmatpush1.bf16.xpose.msra.mxu0 0
    %272 = vmatprep.subr.bf16.mxu0 0
    %273 = vmatpush1.bf16.xpose.msra.mxu0 0
    %274 = vmatprep.subr.bf16.mxu0 0
    %275 = vmatpush1.bf16.xpose.msra.mxu0 0
    %276 = vmatprep.subr.bf16.mxu0 0
    %277 = vmatpush1.bf16.xpose.msra.mxu0 0
    %278 = vmatprep.subr.bf16.mxu0 0
    %279 = vmatpush1.bf16.xpose.msra.mxu0 0
    %280 = vmatprep.subr.bf16.mxu0 0
    %281 = vmatpush1.bf16.xpose.msra.mxu0 0
    %282 = vmatprep.subr.bf16.mxu0 0
    %283 = vmatpush1.bf16.xpose.msra.mxu0 %v266
    %284 = vmatprep.subr.bf16.mxu0 0
    %285 = vmatpush2.bf16.xpose.msra.mxu0 0
    %286 = vmatprep.subr.bf16.mxu0 0
    %287 = vmatpush2.bf16.xpose.msra.mxu0 0
    %288 = vmatprep.subr.bf16.mxu0 0
    %289 = vmatpush2.bf16.xpose.msra.mxu0 0
    %290 = vmatprep.subr.bf16.mxu0 0
    %291 = vmatpush2.bf16.xpose.msra.mxu0 0
    %292 = vmatprep.subr.bf16.mxu0 0
    %293 = vmatpush2.bf16.xpose.msra.mxu0 0
    %294 = vmatprep.subr.bf16.mxu0 0
    %295 = vmatpush2.bf16.xpose.msra.mxu0 0
    %296 = vmatprep.subr.bf16.mxu0 0
    %297 = vmatpush2.bf16.xpose.msra.mxu0 0
    %298 = vmatprep.subr.bf16.mxu0 0
    %299 = vmatpush2.bf16.xpose.msra.mxu0 0
    %300 = vmatprep.mubr.bf16.mxu0 0
    %301 = vmatmul.mubr.bf16.gmra.mxu0 %v263
    %v302 = vpop.f32.mrf.mxu0
    %v303 = vadd.f32 0.0, %v302
    %v304 = vpop.f32.mrf.mxu0
    %v305 = vpop.f32.mrf.mxu0
    %v306 = vpop.f32.mrf.mxu0
    %307 = vdwg.mxu0
    %v308 = vmul.f32 %v254, 0.35355338
    %v309 = vmul.f32 %v303, 0.35355338
    %v310 = vadd.f32 %v308, %v202
    %v311 = vadd.f32 %v309, %v206
    %v312 = vsel %vm212, %v310, -inf
    %313 = vmax.xlane.f32.xlu0 %v312
    %v314 = vpop.xlane.xlu0 %313
    %v315 = vsel %vm212, %v311, -inf
    %316 = vmax.xlane.f32.xlu0 %v315
    %v317 = vpop.xlane.xlu0 %316
    %v318 = vsub.f32 %v310, %v314
    %v319 = vsub.f32 %v311, %v317
    %v320 = vmul.f32 %v318, 1.442695
    %v321 = vpow.pop %v320
    %v322 = vmul.f32 %v319, 1.442695
    %v323 = vpow.pop %v322
    %v324 = vsel %vm212, %v321, 0.0
    %325 = vadd.xlane.f32.xlu0 %v324
    %v326 = vpop.xlane.xlu0 %325
    %v327 = vsel %vm212, %v323, 0.0
    %328 = vadd.xlane.f32.xlu0 %v327
    %v329 = vpop.xlane.xlu0 %328
    %v330 = vrcp.pop %v326
    %v331 = vrcp.pop %v329
    %v332 = vmul.f32 %v321, %v330
    %v333 = vmul.f32 %v323, %v331
    %v334 = vpack.c.bf16 %v332, %v332
    %v335 = vpack.c.bf16 %v333, %v333
    %336 = vrot.lane.b32.xlu0 %v209, 32
    %v337 = vpop.permute.xlu0 %336
    %v339 = vsel %vm212, %v334, 0
    %vm341 = vcmask 1043456
    %v343 = vsel %vm341, %v337, 0
    %345 = vmatprep.subr.bf16.mxu0 0
    %346 = vmatpush1.bf16.msra.mxu0 0
    %347 = vmatprep.subr.bf16.mxu0 0
    %348 = vmatpush1.bf16.msra.mxu0 0
    %349 = vmatprep.subr.bf16.mxu0 0
    %350 = vmatpush1.bf16.msra.mxu0 0
    %351 = vmatprep.subr.bf16.mxu0 0
    %352 = vmatpush1.bf16.msra.mxu0 0
    %353 = vmatprep.subr.bf16.mxu0 0
    %354 = vmatpush1.bf16.msra.mxu0 0
    %355 = vmatprep.subr.bf16.mxu0 0
    %356 = vmatpush1.bf16.msra.mxu0 0
    %357 = vmatprep.subr.bf16.mxu0 0
    %358 = vmatpush1.bf16.msra.mxu0 0
    %359 = vmatprep.subr.bf16.mxu0 0
    %360 = vmatpush1.bf16.msra.mxu0 %v343
    %361 = vmatprep.subr.bf16.mxu0 0
    %362 = vmatpush2.bf16.msra.mxu0 0
    %363 = vmatprep.subr.bf16.mxu0 0
    %364 = vmatpush2.bf16.msra.mxu0 0
    %365 = vmatprep.subr.bf16.mxu0 0
    %366 = vmatpush2.bf16.msra.mxu0 0
    %367 = vmatprep.subr.bf16.mxu0 0
    %368 = vmatpush2.bf16.msra.mxu0 0
    %369 = vmatprep.subr.bf16.mxu0 0
    %370 = vmatpush2.bf16.msra.mxu0 0
    %371 = vmatprep.subr.bf16.mxu0 0
    %372 = vmatpush2.bf16.msra.mxu0 0
    %373 = vmatprep.subr.bf16.mxu0 0
    %374 = vmatpush2.bf16.msra.mxu0 0
    %375 = vmatprep.subr.bf16.mxu0 0
    %376 = vmatpush2.bf16.msra.mxu0 0
    %377 = vmatprep.mubr.bf16.mxu0 0
    %378 = vmatmul.mubr.bf16.gmra.mxu0 %v339
    %v379 = vpop.f32.mrf.mxu0
    %v380 = vadd.f32 0.0, %v379
    %v381 = vpop.f32.mrf.mxu0
    %v382 = vpop.f32.mrf.mxu0
    %v383 = vpop.f32.mrf.mxu0
    %384 = vdwg.mxu0
    %385 = vrot.lane.b32.xlu0 %v259, 32
    %v386 = vpop.permute.xlu0 %385
    %v388 = vsel %vm212, %v335, 0
    %v391 = vsel %vm341, %v386, 0
    %393 = vmatprep.subr.bf16.mxu0 0
    %394 = vmatpush1.bf16.msra.mxu0 0
    %395 = vmatprep.subr.bf16.mxu0 0
    %396 = vmatpush1.bf16.msra.mxu0 0
    %397 = vmatprep.subr.bf16.mxu0 0
    %398 = vmatpush1.bf16.msra.mxu0 0
    %399 = vmatprep.subr.bf16.mxu0 0
    %400 = vmatpush1.bf16.msra.mxu0 0
    %401 = vmatprep.subr.bf16.mxu0 0
    %402 = vmatpush1.bf16.msra.mxu0 0
    %403 = vmatprep.subr.bf16.mxu0 0
    %404 = vmatpush1.bf16.msra.mxu0 0
    %405 = vmatprep.subr.bf16.mxu0 0
    %406 = vmatpush1.bf16.msra.mxu0 0
    %407 = vmatprep.subr.bf16.mxu0 0
    %408 = vmatpush1.bf16.msra.mxu0 %v391
    %409 = vmatprep.subr.bf16.mxu0 0
    %410 = vmatpush2.bf16.msra.mxu0 0
    %411 = vmatprep.subr.bf16.mxu0 0
    %412 = vmatpush2.bf16.msra.mxu0 0
    %413 = vmatprep.subr.bf16.mxu0 0
    %414 = vmatpush2.bf16.msra.mxu0 0
    %415 = vmatprep.subr.bf16.mxu0 0
    %416 = vmatpush2.bf16.msra.mxu0 0
    %417 = vmatprep.subr.bf16.mxu0 0
    %418 = vmatpush2.bf16.msra.mxu0 0
    %419 = vmatprep.subr.bf16.mxu0 0
    %420 = vmatpush2.bf16.msra.mxu0 0
    %421 = vmatprep.subr.bf16.mxu0 0
    %422 = vmatpush2.bf16.msra.mxu0 0
    %423 = vmatprep.subr.bf16.mxu0 0
    %424 = vmatpush2.bf16.msra.mxu0 0
    %425 = vmatprep.mubr.bf16.mxu0 0
    %426 = vmatmul.mubr.bf16.gmra.mxu0 %v388
    %v427 = vpop.f32.mrf.mxu0
    %v428 = vadd.f32 0.0, %v427
    %v429 = vpop.f32.mrf.mxu0
    %v430 = vpop.f32.mrf.mxu0
    %v431 = vpop.f32.mrf.mxu0
    %432 = vdwg.mxu0
    %433 = vrot.lane.b32.xlu0 %v209, 120
    %v434 = vpop.permute.xlu0 %433
    %435 = vrot.lane.b32.xlu0 %v209, 72
    %v436 = vpop.permute.xlu0 %435
    %v438 = vsel %vm212, %v434, 0
    %v441 = vsel %vm212, %v436, 0
    %443 = vmatprep.subr.bf16.mxu0 0
    %444 = vmatpush1.bf16.xpose.msra.mxu0 0
    %445 = vmatprep.subr.bf16.mxu0 0
    %446 = vmatpush1.bf16.xpose.msra.mxu0 0
    %447 = vmatprep.subr.bf16.mxu0 0
    %448 = vmatpush1.bf16.xpose.msra.mxu0 0
    %449 = vmatprep.subr.bf16.mxu0 0
    %450 = vmatpush1.bf16.xpose.msra.mxu0 0
    %451 = vmatprep.subr.bf16.mxu0 0
    %452 = vmatpush1.bf16.xpose.msra.mxu0 0
    %453 = vmatprep.subr.bf16.mxu0 0
    %454 = vmatpush1.bf16.xpose.msra.mxu0 0
    %455 = vmatprep.subr.bf16.mxu0 0
    %456 = vmatpush1.bf16.xpose.msra.mxu0 0
    %457 = vmatprep.subr.bf16.mxu0 0
    %458 = vmatpush1.bf16.xpose.msra.mxu0 %v441
    %459 = vmatprep.subr.bf16.mxu0 0
    %460 = vmatpush2.bf16.xpose.msra.mxu0 0
    %461 = vmatprep.subr.bf16.mxu0 0
    %462 = vmatpush2.bf16.xpose.msra.mxu0 0
    %463 = vmatprep.subr.bf16.mxu0 0
    %464 = vmatpush2.bf16.xpose.msra.mxu0 0
    %465 = vmatprep.subr.bf16.mxu0 0
    %466 = vmatpush2.bf16.xpose.msra.mxu0 0
    %467 = vmatprep.subr.bf16.mxu0 0
    %468 = vmatpush2.bf16.xpose.msra.mxu0 0
    %469 = vmatprep.subr.bf16.mxu0 0
    %470 = vmatpush2.bf16.xpose.msra.mxu0 0
    %471 = vmatprep.subr.bf16.mxu0 0
    %472 = vmatpush2.bf16.xpose.msra.mxu0 0
    %473 = vmatprep.subr.bf16.mxu0 0
    %474 = vmatpush2.bf16.xpose.msra.mxu0 0
    %475 = vmatprep.mubr.bf16.mxu0 0
    %476 = vmatmul.mubr.bf16.gmra.mxu0 %v438
    %v477 = vpop.f32.mrf.mxu0
    %v478 = vadd.f32 0.0, %v477
    %v479 = vpop.f32.mrf.mxu0
    %v480 = vpop.f32.mrf.mxu0
    %v481 = vpop.f32.mrf.mxu0
    %482 = vdwg.mxu0
    %483 = vrot.lane.b32.xlu0 %v259, 120
    %v484 = vpop.permute.xlu0 %483
    %485 = vrot.lane.b32.xlu0 %v259, 72
    %v486 = vpop.permute.xlu0 %485
    %v488 = vsel %vm212, %v484, 0
    %v491 = vsel %vm212, %v486, 0
    %493 = vmatprep.subr.bf16.mxu0 0
    %494 = vmatpush1.bf16.xpose.msra.mxu0 0
    %495 = vmatprep.subr.bf16.mxu0 0
    %496 = vmatpush1.bf16.xpose.msra.mxu0 0
    %497 = vmatprep.subr.bf16.mxu0 0
    %498 = vmatpush1.bf16.xpose.msra.mxu0 0
    %499 = vmatprep.subr.bf16.mxu0 0
    %500 = vmatpush1.bf16.xpose.msra.mxu0 0
    %501 = vmatprep.subr.bf16.mxu0 0
    %502 = vmatpush1.bf16.xpose.msra.mxu0 0
    %503 = vmatprep.subr.bf16.mxu0 0
    %504 = vmatpush1.bf16.xpose.msra.mxu0 0
    %505 = vmatprep.subr.bf16.mxu0 0
    %506 = vmatpush1.bf16.xpose.msra.mxu0 0
    %507 = vmatprep.subr.bf16.mxu0 0
    %508 = vmatpush1.bf16.xpose.msra.mxu0 %v491
    %509 = vmatprep.subr.bf16.mxu0 0
    %510 = vmatpush2.bf16.xpose.msra.mxu0 0
    %511 = vmatprep.subr.bf16.mxu0 0
    %512 = vmatpush2.bf16.xpose.msra.mxu0 0
    %513 = vmatprep.subr.bf16.mxu0 0
    %514 = vmatpush2.bf16.xpose.msra.mxu0 0
    %515 = vmatprep.subr.bf16.mxu0 0
    %516 = vmatpush2.bf16.xpose.msra.mxu0 0
    %517 = vmatprep.subr.bf16.mxu0 0
    %518 = vmatpush2.bf16.xpose.msra.mxu0 0
    %519 = vmatprep.subr.bf16.mxu0 0
    %520 = vmatpush2.bf16.xpose.msra.mxu0 0
    %521 = vmatprep.subr.bf16.mxu0 0
    %522 = vmatpush2.bf16.xpose.msra.mxu0 0
    %523 = vmatprep.subr.bf16.mxu0 0
    %524 = vmatpush2.bf16.xpose.msra.mxu0 0
    %525 = vmatprep.mubr.bf16.mxu0 0
    %526 = vmatmul.mubr.bf16.gmra.mxu0 %v488
    %v527 = vpop.f32.mrf.mxu0
    %v528 = vadd.f32 0.0, %v527
    %v529 = vpop.f32.mrf.mxu0
    %v530 = vpop.f32.mrf.mxu0
    %v531 = vpop.f32.mrf.mxu0
    %532 = vdwg.mxu0
    %v533 = vmul.f32 %v478, 0.35355338
    %v534 = vmul.f32 %v528, 0.35355338
    %v535 = vadd.f32 %v533, %v202
    %v536 = vadd.f32 %v534, %v206
    %v537 = vsel %vm212, %v535, -inf
    %538 = vmax.xlane.f32.xlu0 %v537
    %v539 = vpop.xlane.xlu0 %538
    %v540 = vsel %vm212, %v536, -inf
    %541 = vmax.xlane.f32.xlu0 %v540
    %v542 = vpop.xlane.xlu0 %541
    %v543 = vsub.f32 %v535, %v539
    %v544 = vsub.f32 %v536, %v542
    %v545 = vmul.f32 %v543, 1.442695
    %v546 = vpow.pop %v545
    %v547 = vmul.f32 %v544, 1.442695
    %v548 = vpow.pop %v547
    %v549 = vsel %vm212, %v546, 0.0
    %550 = vadd.xlane.f32.xlu0 %v549
    %v551 = vpop.xlane.xlu0 %550
    %v552 = vsel %vm212, %v548, 0.0
    %553 = vadd.xlane.f32.xlu0 %v552
    %v554 = vpop.xlane.xlu0 %553
    %v555 = vrcp.pop %v551
    %v556 = vrcp.pop %v554
    %v557 = vmul.f32 %v546, %v555
    %v558 = vmul.f32 %v548, %v556
    %v559 = vpack.c.bf16 %v557, %v557
    %v560 = vpack.c.bf16 %v558, %v558
    %561 = vrot.lane.b32.xlu0 %v209, 24
    %v562 = vpop.permute.xlu0 %561
    %v564 = vsel %vm212, %v559, 0
    %v567 = vsel %vm341, %v562, 0
    %569 = vmatprep.subr.bf16.mxu0 0
    %570 = vmatpush1.bf16.msra.mxu0 0
    %571 = vmatprep.subr.bf16.mxu0 0
    %572 = vmatpush1.bf16.msra.mxu0 0
    %573 = vmatprep.subr.bf16.mxu0 0
    %574 = vmatpush1.bf16.msra.mxu0 0
    %575 = vmatprep.subr.bf16.mxu0 0
    %576 = vmatpush1.bf16.msra.mxu0 0
    %577 = vmatprep.subr.bf16.mxu0 0
    %578 = vmatpush1.bf16.msra.mxu0 0
    %579 = vmatprep.subr.bf16.mxu0 0
    %580 = vmatpush1.bf16.msra.mxu0 0
    %581 = vmatprep.subr.bf16.mxu0 0
    %582 = vmatpush1.bf16.msra.mxu0 0
    %583 = vmatprep.subr.bf16.mxu0 0
    %584 = vmatpush1.bf16.msra.mxu0 %v567
    %585 = vmatprep.subr.bf16.mxu0 0
    %586 = vmatpush2.bf16.msra.mxu0 0
    %587 = vmatprep.subr.bf16.mxu0 0
    %588 = vmatpush2.bf16.msra.mxu0 0
    %589 = vmatprep.subr.bf16.mxu0 0
    %590 = vmatpush2.bf16.msra.mxu0 0
    %591 = vmatprep.subr.bf16.mxu0 0
    %592 = vmatpush2.bf16.msra.mxu0 0
    %593 = vmatprep.subr.bf16.mxu0 0
    %594 = vmatpush2.bf16.msra.mxu0 0
    %595 = vmatprep.subr.bf16.mxu0 0
    %596 = vmatpush2.bf16.msra.mxu0 0
    %597 = vmatprep.subr.bf16.mxu0 0
    %598 = vmatpush2.bf16.msra.mxu0 0
    %599 = vmatprep.subr.bf16.mxu0 0
    %600 = vmatpush2.bf16.msra.mxu0 0
    %601 = vmatprep.mubr.bf16.mxu0 0
    %602 = vmatmul.mubr.bf16.gmra.mxu0 %v564
    %v603 = vpop.f32.mrf.mxu0
    %v604 = vadd.f32 0.0, %v603
    %v605 = vpop.f32.mrf.mxu0
    %v606 = vpop.f32.mrf.mxu0
    %v607 = vpop.f32.mrf.mxu0
    %608 = vdwg.mxu0
    %609 = vrot.lane.b32.xlu0 %v259, 24
    %v610 = vpop.permute.xlu0 %609
    %v612 = vsel %vm212, %v560, 0
    %v615 = vsel %vm341, %v610, 0
    %617 = vmatprep.subr.bf16.mxu0 0
    %618 = vmatpush1.bf16.msra.mxu0 0
    %619 = vmatprep.subr.bf16.mxu0 0
    %620 = vmatpush1.bf16.msra.mxu0 0
    %621 = vmatprep.subr.bf16.mxu0 0
    %622 = vmatpush1.bf16.msra.mxu0 0
    %623 = vmatprep.subr.bf16.mxu0 0
    %624 = vmatpush1.bf16.msra.mxu0 0
    %625 = vmatprep.subr.bf16.mxu0 0
    %626 = vmatpush1.bf16.msra.mxu0 0
    %627 = vmatprep.subr.bf16.mxu0 0
    %628 = vmatpush1.bf16.msra.mxu0 0
    %629 = vmatprep.subr.bf16.mxu0 0
    %630 = vmatpush1.bf16.msra.mxu0 0
    %631 = vmatprep.subr.bf16.mxu0 0
    %632 = vmatpush1.bf16.msra.mxu0 %v615
    %633 = vmatprep.subr.bf16.mxu0 0
    %634 = vmatpush2.bf16.msra.mxu0 0
    %635 = vmatprep.subr.bf16.mxu0 0
    %636 = vmatpush2.bf16.msra.mxu0 0
    %637 = vmatprep.subr.bf16.mxu0 0
    %638 = vmatpush2.bf16.msra.mxu0 0
    %639 = vmatprep.subr.bf16.mxu0 0
    %640 = vmatpush2.bf16.msra.mxu0 0
    %641 = vmatprep.subr.bf16.mxu0 0
    %642 = vmatpush2.bf16.msra.mxu0 0
    %643 = vmatprep.subr.bf16.mxu0 0
    %644 = vmatpush2.bf16.msra.mxu0 0
    %645 = vmatprep.subr.bf16.mxu0 0
    %646 = vmatpush2.bf16.msra.mxu0 0
    %647 = vmatprep.subr.bf16.mxu0 0
    %648 = vmatpush2.bf16.msra.mxu0 0
    %649 = vmatprep.mubr.bf16.mxu0 0
    %650 = vmatmul.mubr.bf16.gmra.mxu0 %v612
    %v651 = vpop.f32.mrf.mxu0
    %v652 = vadd.f32 0.0, %v651
    %v653 = vpop.f32.mrf.mxu0
    %v654 = vpop.f32.mrf.mxu0
    %v655 = vpop.f32.mrf.mxu0
    %656 = vdwg.mxu0
    %657 = vrot.lane.b32.xlu0 %v209, 112
    %v658 = vpop.permute.xlu0 %657
    %659 = vrot.lane.b32.xlu0 %v209, 64
    %v660 = vpop.permute.xlu0 %659
    %v662 = vsel %vm212, %v658, 0
    %v665 = vsel %vm212, %v660, 0
    %667 = vmatprep.subr.bf16.mxu0 0
    %668 = vmatpush1.bf16.xpose.msra.mxu0 0
    %669 = vmatprep.subr.bf16.mxu0 0
    %670 = vmatpush1.bf16.xpose.msra.mxu0 0
    %671 = vmatprep.subr.bf16.mxu0 0
    %672 = vmatpush1.bf16.xpose.msra.mxu0 0
    %673 = vmatprep.subr.bf16.mxu0 0
    %674 = vmatpush1.bf16.xpose.msra.mxu0 0
    %675 = vmatprep.subr.bf16.mxu0 0
    %676 = vmatpush1.bf16.xpose.msra.mxu0 0
    %677 = vmatprep.subr.bf16.mxu0 0
    %678 = vmatpush1.bf16.xpose.msra.mxu0 0
    %679 = vmatprep.subr.bf16.mxu0 0
    %680 = vmatpush1.bf16.xpose.msra.mxu0 0
    %681 = vmatprep.subr.bf16.mxu0 0
    %682 = vmatpush1.bf16.xpose.msra.mxu0 %v665
    %683 = vmatprep.subr.bf16.mxu0 0
    %684 = vmatpush2.bf16.xpose.msra.mxu0 0
    %685 = vmatprep.subr.bf16.mxu0 0
    %686 = vmatpush2.bf16.xpose.msra.mxu0 0
    %687 = vmatprep.subr.bf16.mxu0 0
    %688 = vmatpush2.bf16.xpose.msra.mxu0 0
    %689 = vmatprep.subr.bf16.mxu0 0
    %690 = vmatpush2.bf16.xpose.msra.mxu0 0
    %691 = vmatprep.subr.bf16.mxu0 0
    %692 = vmatpush2.bf16.xpose.msra.mxu0 0
    %693 = vmatprep.subr.bf16.mxu0 0
    %694 = vmatpush2.bf16.xpose.msra.mxu0 0
    %695 = vmatprep.subr.bf16.mxu0 0
    %696 = vmatpush2.bf16.xpose.msra.mxu0 0
    %697 = vmatprep.subr.bf16.mxu0 0
    %698 = vmatpush2.bf16.xpose.msra.mxu0 0
    %699 = vmatprep.mubr.bf16.mxu0 0
    %700 = vmatmul.mubr.bf16.gmra.mxu0 %v662
    %v701 = vpop.f32.mrf.mxu0
    %v702 = vadd.f32 0.0, %v701
    %v703 = vpop.f32.mrf.mxu0
    %v704 = vpop.f32.mrf.mxu0
    %v705 = vpop.f32.mrf.mxu0
    %706 = vdwg.mxu0
    %707 = vrot.lane.b32.xlu0 %v259, 112
    %v708 = vpop.permute.xlu0 %707
    %709 = vrot.lane.b32.xlu0 %v259, 64
    %v710 = vpop.permute.xlu0 %709
    %v712 = vsel %vm212, %v708, 0
    %v715 = vsel %vm212, %v710, 0
    %717 = vmatprep.subr.bf16.mxu0 0
    %718 = vmatpush1.bf16.xpose.msra.mxu0 0
    %719 = vmatprep.subr.bf16.mxu0 0
    %720 = vmatpush1.bf16.xpose.msra.mxu0 0
    %721 = vmatprep.subr.bf16.mxu0 0
    %722 = vmatpush1.bf16.xpose.msra.mxu0 0
    %723 = vmatprep.subr.bf16.mxu0 0
    %724 = vmatpush1.bf16.xpose.msra.mxu0 0
    %725 = vmatprep.subr.bf16.mxu0 0
    %726 = vmatpush1.bf16.xpose.msra.mxu0 0
    %727 = vmatprep.subr.bf16.mxu0 0
    %728 = vmatpush1.bf16.xpose.msra.mxu0 0
    %729 = vmatprep.subr.bf16.mxu0 0
    %730 = vmatpush1.bf16.xpose.msra.mxu0 0
    %731 = vmatprep.subr.bf16.mxu0 0
    %732 = vmatpush1.bf16.xpose.msra.mxu0 %v715
    %733 = vmatprep.subr.bf16.mxu0 0
    %734 = vmatpush2.bf16.xpose.msra.mxu0 0
    %735 = vmatprep.subr.bf16.mxu0 0
    %736 = vmatpush2.bf16.xpose.msra.mxu0 0
    %737 = vmatprep.subr.bf16.mxu0 0
    %738 = vmatpush2.bf16.xpose.msra.mxu0 0
    %739 = vmatprep.subr.bf16.mxu0 0
    %740 = vmatpush2.bf16.xpose.msra.mxu0 0
    %741 = vmatprep.subr.bf16.mxu0 0
    %742 = vmatpush2.bf16.xpose.msra.mxu0 0
    %743 = vmatprep.subr.bf16.mxu0 0
    %744 = vmatpush2.bf16.xpose.msra.mxu0 0
    %745 = vmatprep.subr.bf16.mxu0 0
    %746 = vmatpush2.bf16.xpose.msra.mxu0 0
    %747 = vmatprep.subr.bf16.mxu0 0
    %748 = vmatpush2.bf16.xpose.msra.mxu0 0
    %749 = vmatprep.mubr.bf16.mxu0 0
    %750 = vmatmul.mubr.bf16.gmra.mxu0 %v712
    %v751 = vpop.f32.mrf.mxu0
    %v752 = vadd.f32 0.0, %v751
    %v753 = vpop.f32.mrf.mxu0
    %v754 = vpop.f32.mrf.mxu0
    %v755 = vpop.f32.mrf.mxu0
    %756 = vdwg.mxu0
    %v757 = vmul.f32 %v702, 0.35355338
    %v758 = vmul.f32 %v752, 0.35355338
    %v759 = vadd.f32 %v757, %v202
    %v760 = vadd.f32 %v758, %v206
    %v761 = vsel %vm212, %v759, -inf
    %762 = vmax.xlane.f32.xlu0 %v761
    %v763 = vpop.xlane.xlu0 %762
    %v764 = vsel %vm212, %v760, -inf
    %765 = vmax.xlane.f32.xlu0 %v764
    %v766 = vpop.xlane.xlu0 %765
    %v767 = vsub.f32 %v759, %v763
    %v768 = vsub.f32 %v760, %v766
    %v769 = vmul.f32 %v767, 1.442695
    %v770 = vpow.pop %v769
    %v771 = vmul.f32 %v768, 1.442695
    %v772 = vpow.pop %v771
    %v773 = vsel %vm212, %v770, 0.0
    %774 = vadd.xlane.f32.xlu0 %v773
    %v775 = vpop.xlane.xlu0 %774
    %v776 = vsel %vm212, %v772, 0.0
    %777 = vadd.xlane.f32.xlu0 %v776
    %v778 = vpop.xlane.xlu0 %777
    %v779 = vrcp.pop %v775
    %v780 = vrcp.pop %v778
    %v781 = vmul.f32 %v770, %v779
    %v782 = vmul.f32 %v772, %v780
    %v783 = vpack.c.bf16 %v781, %v781
    %v784 = vpack.c.bf16 %v782, %v782
    %785 = vrot.lane.b32.xlu0 %v209, 16
    %v786 = vpop.permute.xlu0 %785
    %v788 = vsel %vm212, %v783, 0
    %v791 = vsel %vm341, %v786, 0
    %793 = vmatprep.subr.bf16.mxu0 0
    %794 = vmatpush1.bf16.msra.mxu0 0
    %795 = vmatprep.subr.bf16.mxu0 0
    %796 = vmatpush1.bf16.msra.mxu0 0
    %797 = vmatprep.subr.bf16.mxu0 0
    %798 = vmatpush1.bf16.msra.mxu0 0
    %799 = vmatprep.subr.bf16.mxu0 0
    %800 = vmatpush1.bf16.msra.mxu0 0
    %801 = vmatprep.subr.bf16.mxu0 0
    %802 = vmatpush1.bf16.msra.mxu0 0
    %803 = vmatprep.subr.bf16.mxu0 0
    %804 = vmatpush1.bf16.msra.mxu0 0
    %805 = vmatprep.subr.bf16.mxu0 0
    %806 = vmatpush1.bf16.msra.mxu0 0
    %807 = vmatprep.subr.bf16.mxu0 0
    %808 = vmatpush1.bf16.msra.mxu0 %v791
    %809 = vmatprep.subr.bf16.mxu0 0
    %810 = vmatpush2.bf16.msra.mxu0 0
    %811 = vmatprep.subr.bf16.mxu0 0
    %812 = vmatpush2.bf16.msra.mxu0 0
    %813 = vmatprep.subr.bf16.mxu0 0
    %814 = vmatpush2.bf16.msra.mxu0 0
    %815 = vmatprep.subr.bf16.mxu0 0
    %816 = vmatpush2.bf16.msra.mxu0 0
    %817 = vmatprep.subr.bf16.mxu0 0
    %818 = vmatpush2.bf16.msra.mxu0 0
    %819 = vmatprep.subr.bf16.mxu0 0
    %820 = vmatpush2.bf16.msra.mxu0 0
    %821 = vmatprep.subr.bf16.mxu0 0
    %822 = vmatpush2.bf16.msra.mxu0 0
    %823 = vmatprep.subr.bf16.mxu0 0
    %824 = vmatpush2.bf16.msra.mxu0 0
    %825 = vmatprep.mubr.bf16.mxu0 0
    %826 = vmatmul.mubr.bf16.gmra.mxu0 %v788
    %v827 = vpop.f32.mrf.mxu0
    %v828 = vadd.f32 0.0, %v827
    %v829 = vpop.f32.mrf.mxu0
    %v830 = vpop.f32.mrf.mxu0
    %v831 = vpop.f32.mrf.mxu0
    %832 = vdwg.mxu0
    %833 = vrot.lane.b32.xlu0 %v259, 16
    %v834 = vpop.permute.xlu0 %833
    %v836 = vsel %vm212, %v784, 0
    %v839 = vsel %vm341, %v834, 0
    %841 = vmatprep.subr.bf16.mxu0 0
    %842 = vmatpush1.bf16.msra.mxu0 0
    %843 = vmatprep.subr.bf16.mxu0 0
    %844 = vmatpush1.bf16.msra.mxu0 0
    %845 = vmatprep.subr.bf16.mxu0 0
    %846 = vmatpush1.bf16.msra.mxu0 0
    %847 = vmatprep.subr.bf16.mxu0 0
    %848 = vmatpush1.bf16.msra.mxu0 0
    %849 = vmatprep.subr.bf16.mxu0 0
    %850 = vmatpush1.bf16.msra.mxu0 0
    %851 = vmatprep.subr.bf16.mxu0 0
    %852 = vmatpush1.bf16.msra.mxu0 0
    %853 = vmatprep.subr.bf16.mxu0 0
    %854 = vmatpush1.bf16.msra.mxu0 0
    %855 = vmatprep.subr.bf16.mxu0 0
    %856 = vmatpush1.bf16.msra.mxu0 %v839
    %857 = vmatprep.subr.bf16.mxu0 0
    %858 = vmatpush2.bf16.msra.mxu0 0
    %859 = vmatprep.subr.bf16.mxu0 0
    %860 = vmatpush2.bf16.msra.mxu0 0
    %861 = vmatprep.subr.bf16.mxu0 0
    %862 = vmatpush2.bf16.msra.mxu0 0
    %863 = vmatprep.subr.bf16.mxu0 0
    %864 = vmatpush2.bf16.msra.mxu0 0
    %865 = vmatprep.subr.bf16.mxu0 0
    %866 = vmatpush2.bf16.msra.mxu0 0
    %867 = vmatprep.subr.bf16.mxu0 0
    %868 = vmatpush2.bf16.msra.mxu0 0
    %869 = vmatprep.subr.bf16.mxu0 0
    %870 = vmatpush2.bf16.msra.mxu0 0
    %871 = vmatprep.subr.bf16.mxu0 0
    %872 = vmatpush2.bf16.msra.mxu0 0
    %873 = vmatprep.mubr.bf16.mxu0 0
    %874 = vmatmul.mubr.bf16.gmra.mxu0 %v836
    %v875 = vpop.f32.mrf.mxu0
    %v876 = vadd.f32 0.0, %v875
    %v877 = vpop.f32.mrf.mxu0
    %v878 = vpop.f32.mrf.mxu0
    %v879 = vpop.f32.mrf.mxu0
    %880 = vdwg.mxu0
    %881 = vrot.lane.b32.xlu0 %v209, 104
    %v882 = vpop.permute.xlu0 %881
    %883 = vrot.lane.b32.xlu0 %v209, 56
    %v884 = vpop.permute.xlu0 %883
    %v886 = vsel %vm212, %v882, 0
    %v889 = vsel %vm212, %v884, 0
    %891 = vmatprep.subr.bf16.mxu0 0
    %892 = vmatpush1.bf16.xpose.msra.mxu0 0
    %893 = vmatprep.subr.bf16.mxu0 0
    %894 = vmatpush1.bf16.xpose.msra.mxu0 0
    %895 = vmatprep.subr.bf16.mxu0 0
    %896 = vmatpush1.bf16.xpose.msra.mxu0 0
    %897 = vmatprep.subr.bf16.mxu0 0
    %898 = vmatpush1.bf16.xpose.msra.mxu0 0
    %899 = vmatprep.subr.bf16.mxu0 0
    %900 = vmatpush1.bf16.xpose.msra.mxu0 0
    %901 = vmatprep.subr.bf16.mxu0 0
    %902 = vmatpush1.bf16.xpose.msra.mxu0 0
    %903 = vmatprep.subr.bf16.mxu0 0
    %904 = vmatpush1.bf16.xpose.msra.mxu0 0
    %905 = vmatprep.subr.bf16.mxu0 0
    %906 = vmatpush1.bf16.xpose.msra.mxu0 %v889
    %907 = vmatprep.subr.bf16.mxu0 0
    %908 = vmatpush2.bf16.xpose.msra.mxu0 0
    %909 = vmatprep.subr.bf16.mxu0 0
    %910 = vmatpush2.bf16.xpose.msra.mxu0 0
    %911 = vmatprep.subr.bf16.mxu0 0
    %912 = vmatpush2.bf16.xpose.msra.mxu0 0
    %913 = vmatprep.subr.bf16.mxu0 0
    %914 = vmatpush2.bf16.xpose.msra.mxu0 0
    %915 = vmatprep.subr.bf16.mxu0 0
    %916 = vmatpush2.bf16.xpose.msra.mxu0 0
    %917 = vmatprep.subr.bf16.mxu0 0
    %918 = vmatpush2.bf16.xpose.msra.mxu0 0
    %919 = vmatprep.subr.bf16.mxu0 0
    %920 = vmatpush2.bf16.xpose.msra.mxu0 0
    %921 = vmatprep.subr.bf16.mxu0 0
    %922 = vmatpush2.bf16.xpose.msra.mxu0 0
    %923 = vmatprep.mubr.bf16.mxu0 0
    %924 = vmatmul.mubr.bf16.gmra.mxu0 %v886
    %v925 = vpop.f32.mrf.mxu0
    %v926 = vadd.f32 0.0, %v925
    %v927 = vpop.f32.mrf.mxu0
    %v928 = vpop.f32.mrf.mxu0
    %v929 = vpop.f32.mrf.mxu0
    %930 = vdwg.mxu0
    %931 = vrot.lane.b32.xlu0 %v259, 104
    %v932 = vpop.permute.xlu0 %931
    %933 = vrot.lane.b32.xlu0 %v259, 56
    %v934 = vpop.permute.xlu0 %933
    %v936 = vsel %vm212, %v932, 0
    %v939 = vsel %vm212, %v934, 0
    %941 = vmatprep.subr.bf16.mxu0 0
    %942 = vmatpush1.bf16.xpose.msra.mxu0 0
    %943 = vmatprep.subr.bf16.mxu0 0
    %944 = vmatpush1.bf16.xpose.msra.mxu0 0
    %945 = vmatprep.subr.bf16.mxu0 0
    %946 = vmatpush1.bf16.xpose.msra.mxu0 0
    %947 = vmatprep.subr.bf16.mxu0 0
    %948 = vmatpush1.bf16.xpose.msra.mxu0 0
    %949 = vmatprep.subr.bf16.mxu0 0
    %950 = vmatpush1.bf16.xpose.msra.mxu0 0
    %951 = vmatprep.subr.bf16.mxu0 0
    %952 = vmatpush1.bf16.xpose.msra.mxu0 0
    %953 = vmatprep.subr.bf16.mxu0 0
    %954 = vmatpush1.bf16.xpose.msra.mxu0 0
    %955 = vmatprep.subr.bf16.mxu0 0
    %956 = vmatpush1.bf16.xpose.msra.mxu0 %v939
    %957 = vmatprep.subr.bf16.mxu0 0
    %958 = vmatpush2.bf16.xpose.msra.mxu0 0
    %959 = vmatprep.subr.bf16.mxu0 0
    %960 = vmatpush2.bf16.xpose.msra.mxu0 0
    %961 = vmatprep.subr.bf16.mxu0 0
    %962 = vmatpush2.bf16.xpose.msra.mxu0 0
    %963 = vmatprep.subr.bf16.mxu0 0
    %964 = vmatpush2.bf16.xpose.msra.mxu0 0
    %965 = vmatprep.subr.bf16.mxu0 0
    %966 = vmatpush2.bf16.xpose.msra.mxu0 0
    %967 = vmatprep.subr.bf16.mxu0 0
    %968 = vmatpush2.bf16.xpose.msra.mxu0 0
    %969 = vmatprep.subr.bf16.mxu0 0
    %970 = vmatpush2.bf16.xpose.msra.mxu0 0
    %971 = vmatprep.subr.bf16.mxu0 0
    %972 = vmatpush2.bf16.xpose.msra.mxu0 0
    %973 = vmatprep.mubr.bf16.mxu0 0
    %974 = vmatmul.mubr.bf16.gmra.mxu0 %v936
    %v975 = vpop.f32.mrf.mxu0
    %v976 = vadd.f32 0.0, %v975
    %v977 = vpop.f32.mrf.mxu0
    %v978 = vpop.f32.mrf.mxu0
    %v979 = vpop.f32.mrf.mxu0
    %980 = vdwg.mxu0
    %v981 = vmul.f32 %v926, 0.35355338
    %v982 = vmul.f32 %v976, 0.35355338
    %v983 = vadd.f32 %v981, %v202
    %v984 = vadd.f32 %v982, %v206
    %v985 = vsel %vm212, %v983, -inf
    %986 = vmax.xlane.f32.xlu0 %v985
    %v987 = vpop.xlane.xlu0 %986
    %v988 = vsel %vm212, %v984, -inf
    %989 = vmax.xlane.f32.xlu0 %v988
    %v990 = vpop.xlane.xlu0 %989
    %v991 = vsub.f32 %v983, %v987
    %v992 = vsub.f32 %v984, %v990
    %v993 = vmul.f32 %v991, 1.442695
    %v994 = vpow.pop %v993
    %v995 = vmul.f32 %v992, 1.442695
    %v996 = vpow.pop %v995
    %v997 = vsel %vm212, %v994, 0.0
    %998 = vadd.xlane.f32.xlu0 %v997
    %v999 = vpop.xlane.xlu0 %998
    %v1000 = vsel %vm212, %v996, 0.0
    %1001 = vadd.xlane.f32.xlu0 %v1000
    %v1002 = vpop.xlane.xlu0 %1001
    %v1003 = vrcp.pop %v999
    %v1004 = vrcp.pop %v1002
    %v1005 = vmul.f32 %v994, %v1003
    %v1006 = vmul.f32 %v996, %v1004
    %v1007 = vpack.c.bf16 %v1005, %v1005
    %v1008 = vpack.c.bf16 %v1006, %v1006
    %1009 = vrot.lane.b32.xlu0 %v209, 8
    %v1010 = vpop.permute.xlu0 %1009
    %v1012 = vsel %vm212, %v1007, 0
    %v1015 = vsel %vm341, %v1010, 0
    %1017 = vmatprep.subr.bf16.mxu0 0
    %1018 = vmatpush1.bf16.msra.mxu0 0
    %1019 = vmatprep.subr.bf16.mxu0 0
    %1020 = vmatpush1.bf16.msra.mxu0 0
    %1021 = vmatprep.subr.bf16.mxu0 0
    %1022 = vmatpush1.bf16.msra.mxu0 0
    %1023 = vmatprep.subr.bf16.mxu0 0
    %1024 = vmatpush1.bf16.msra.mxu0 0
    %1025 = vmatprep.subr.bf16.mxu0 0
    %1026 = vmatpush1.bf16.msra.mxu0 0
    %1027 = vmatprep.subr.bf16.mxu0 0
    %1028 = vmatpush1.bf16.msra.mxu0 0
    %1029 = vmatprep.subr.bf16.mxu0 0
    %1030 = vmatpush1.bf16.msra.mxu0 0
    %1031 = vmatprep.subr.bf16.mxu0 0
    %1032 = vmatpush1.bf16.msra.mxu0 %v1015
    %1033 = vmatprep.subr.bf16.mxu0 0
    %1034 = vmatpush2.bf16.msra.mxu0 0
    %1035 = vmatprep.subr.bf16.mxu0 0
    %1036 = vmatpush2.bf16.msra.mxu0 0
    %1037 = vmatprep.subr.bf16.mxu0 0
    %1038 = vmatpush2.bf16.msra.mxu0 0
    %1039 = vmatprep.subr.bf16.mxu0 0
    %1040 = vmatpush2.bf16.msra.mxu0 0
    %1041 = vmatprep.subr.bf16.mxu0 0
    %1042 = vmatpush2.bf16.msra.mxu0 0
    %1043 = vmatprep.subr.bf16.mxu0 0
    %1044 = vmatpush2.bf16.msra.mxu0 0
    %1045 = vmatprep.subr.bf16.mxu0 0
    %1046 = vmatpush2.bf16.msra.mxu0 0
    %1047 = vmatprep.subr.bf16.mxu0 0
    %1048 = vmatpush2.bf16.msra.mxu0 0
    %1049 = vmatprep.mubr.bf16.mxu0 0
    %1050 = vmatmul.mubr.bf16.gmra.mxu0 %v1012
    %v1051 = vpop.f32.mrf.mxu0
    %v1052 = vadd.f32 0.0, %v1051
    %v1053 = vpop.f32.mrf.mxu0
    %v1054 = vpop.f32.mrf.mxu0
    %v1055 = vpop.f32.mrf.mxu0
    %1056 = vdwg.mxu0
    %1057 = vrot.lane.b32.xlu0 %v259, 8
    %v1058 = vpop.permute.xlu0 %1057
    %v1060 = vsel %vm212, %v1008, 0
    %v1063 = vsel %vm341, %v1058, 0
    %1065 = vmatprep.subr.bf16.mxu0 0
    %1066 = vmatpush1.bf16.msra.mxu0 0
    %1067 = vmatprep.subr.bf16.mxu0 0
    %1068 = vmatpush1.bf16.msra.mxu0 0
    %1069 = vmatprep.subr.bf16.mxu0 0
    %1070 = vmatpush1.bf16.msra.mxu0 0
    %1071 = vmatprep.subr.bf16.mxu0 0
    %1072 = vmatpush1.bf16.msra.mxu0 0
    %1073 = vmatprep.subr.bf16.mxu0 0
    %1074 = vmatpush1.bf16.msra.mxu0 0
    %1075 = vmatprep.subr.bf16.mxu0 0
    %1076 = vmatpush1.bf16.msra.mxu0 0
    %1077 = vmatprep.subr.bf16.mxu0 0
    %1078 = vmatpush1.bf16.msra.mxu0 0
    %1079 = vmatprep.subr.bf16.mxu0 0
    %1080 = vmatpush1.bf16.msra.mxu0 %v1063
    %1081 = vmatprep.subr.bf16.mxu0 0
    %1082 = vmatpush2.bf16.msra.mxu0 0
    %1083 = vmatprep.subr.bf16.mxu0 0
    %1084 = vmatpush2.bf16.msra.mxu0 0
    %1085 = vmatprep.subr.bf16.mxu0 0
    %1086 = vmatpush2.bf16.msra.mxu0 0
    %1087 = vmatprep.subr.bf16.mxu0 0
    %1088 = vmatpush2.bf16.msra.mxu0 0
    %1089 = vmatprep.subr.bf16.mxu0 0
    %1090 = vmatpush2.bf16.msra.mxu0 0
    %1091 = vmatprep.subr.bf16.mxu0 0
    %1092 = vmatpush2.bf16.msra.mxu0 0
    %1093 = vmatprep.subr.bf16.mxu0 0
    %1094 = vmatpush2.bf16.msra.mxu0 0
    %1095 = vmatprep.subr.bf16.mxu0 0
    %1096 = vmatpush2.bf16.msra.mxu0 0
    %1097 = vmatprep.mubr.bf16.mxu0 0
    %1098 = vmatmul.mubr.bf16.gmra.mxu0 %v1060
    %v1099 = vpop.f32.mrf.mxu0
    %v1100 = vadd.f32 0.0, %v1099
    %v1101 = vpop.f32.mrf.mxu0
    %v1102 = vpop.f32.mrf.mxu0
    %v1103 = vpop.f32.mrf.mxu0
    %1104 = vdwg.mxu0
    %1105 = vrot.lane.b32.xlu0 %v209, 96
    %v1106 = vpop.permute.xlu0 %1105
    %1107 = vrot.lane.b32.xlu0 %v209, 48
    %v1108 = vpop.permute.xlu0 %1107
    %v1110 = vsel %vm212, %v1106, 0
    %v1113 = vsel %vm212, %v1108, 0
    %1115 = vmatprep.subr.bf16.mxu0 0
    %1116 = vmatpush1.bf16.xpose.msra.mxu0 0
    %1117 = vmatprep.subr.bf16.mxu0 0
    %1118 = vmatpush1.bf16.xpose.msra.mxu0 0
    %1119 = vmatprep.subr.bf16.mxu0 0
    %1120 = vmatpush1.bf16.xpose.msra.mxu0 0
    %1121 = vmatprep.subr.bf16.mxu0 0
    %1122 = vmatpush1.bf16.xpose.msra.mxu0 0
    %1123 = vmatprep.subr.bf16.mxu0 0
    %1124 = vmatpush1.bf16.xpose.msra.mxu0 0
    %1125 = vmatprep.subr.bf16.mxu0 0
    %1126 = vmatpush1.bf16.xpose.msra.mxu0 0
    %1127 = vmatprep.subr.bf16.mxu0 0
    %1128 = vmatpush1.bf16.xpose.msra.mxu0 0
    %1129 = vmatprep.subr.bf16.mxu0 0
    %1130 = vmatpush1.bf16.xpose.msra.mxu0 %v1113
    %1131 = vmatprep.subr.bf16.mxu0 0
    %1132 = vmatpush2.bf16.xpose.msra.mxu0 0
    %1133 = vmatprep.subr.bf16.mxu0 0
    %1134 = vmatpush2.bf16.xpose.msra.mxu0 0
    %1135 = vmatprep.subr.bf16.mxu0 0
    %1136 = vmatpush2.bf16.xpose.msra.mxu0 0
    %1137 = vmatprep.subr.bf16.mxu0 0
    %1138 = vmatpush2.bf16.xpose.msra.mxu0 0
    %1139 = vmatprep.subr.bf16.mxu0 0
    %1140 = vmatpush2.bf16.xpose.msra.mxu0 0
    %1141 = vmatprep.subr.bf16.mxu0 0
    %1142 = vmatpush2.bf16.xpose.msra.mxu0 0
    %1143 = vmatprep.subr.bf16.mxu0 0
    %1144 = vmatpush2.bf16.xpose.msra.mxu0 0
    %1145 = vmatprep.subr.bf16.mxu0 0
    %1146 = vmatpush2.bf16.xpose.msra.mxu0 0
    %1147 = vmatprep.mubr.bf16.mxu0 0
    %1148 = vmatmul.mubr.bf16.gmra.mxu0 %v1110
    %v1149 = vpop.f32.mrf.mxu0
    %v1150 = vadd.f32 0.0, %v1149
    %v1151 = vpop.f32.mrf.mxu0
    %v1152 = vpop.f32.mrf.mxu0
    %v1153 = vpop.f32.mrf.mxu0
    %1154 = vdwg.mxu0
    %1155 = vrot.lane.b32.xlu0 %v259, 96
    %v1156 = vpop.permute.xlu0 %1155
    %1157 = vrot.lane.b32.xlu0 %v259, 48
    %v1158 = vpop.permute.xlu0 %1157
    %v1160 = vsel %vm212, %v1156, 0
    %v1163 = vsel %vm212, %v1158, 0
    %1165 = vmatprep.subr.bf16.mxu0 0
    %1166 = vmatpush1.bf16.xpose.msra.mxu0 0
    %1167 = vmatprep.subr.bf16.mxu0 0
    %1168 = vmatpush1.bf16.xpose.msra.mxu0 0
    %1169 = vmatprep.subr.bf16.mxu0 0
    %1170 = vmatpush1.bf16.xpose.msra.mxu0 0
    %1171 = vmatprep.subr.bf16.mxu0 0
    %1172 = vmatpush1.bf16.xpose.msra.mxu0 0
    %1173 = vmatprep.subr.bf16.mxu0 0
    %1174 = vmatpush1.bf16.xpose.msra.mxu0 0
    %1175 = vmatprep.subr.bf16.mxu0 0
    %1176 = vmatpush1.bf16.xpose.msra.mxu0 0
    %1177 = vmatprep.subr.bf16.mxu0 0
    %1178 = vmatpush1.bf16.xpose.msra.mxu0 0
    %1179 = vmatprep.subr.bf16.mxu0 0
    %1180 = vmatpush1.bf16.xpose.msra.mxu0 %v1163
    %1181 = vmatprep.subr.bf16.mxu0 0
    %1182 = vmatpush2.bf16.xpose.msra.mxu0 0
    %1183 = vmatprep.subr.bf16.mxu0 0
    %1184 = vmatpush2.bf16.xpose.msra.mxu0 0
    %1185 = vmatprep.subr.bf16.mxu0 0
    %1186 = vmatpush2.bf16.xpose.msra.mxu0 0
    %1187 = vmatprep.subr.bf16.mxu0 0
    %1188 = vmatpush2.bf16.xpose.msra.mxu0 0
    %1189 = vmatprep.subr.bf16.mxu0 0
    %1190 = vmatpush2.bf16.xpose.msra.mxu0 0
    %1191 = vmatprep.subr.bf16.mxu0 0
    %1192 = vmatpush2.bf16.xpose.msra.mxu0 0
    %1193 = vmatprep.subr.bf16.mxu0 0
    %1194 = vmatpush2.bf16.xpose.msra.mxu0 0
    %1195 = vmatprep.subr.bf16.mxu0 0
    %1196 = vmatpush2.bf16.xpose.msra.mxu0 0
    %1197 = vmatprep.mubr.bf16.mxu0 0
    %1198 = vmatmul.mubr.bf16.gmra.mxu0 %v1160
    %v1199 = vpop.f32.mrf.mxu0
    %v1200 = vadd.f32 0.0, %v1199
    %v1201 = vpop.f32.mrf.mxu0
    %v1202 = vpop.f32.mrf.mxu0
    %v1203 = vpop.f32.mrf.mxu0
    %1204 = vdwg.mxu0
    %v1205 = vmul.f32 %v1150, 0.35355338
    %v1206 = vmul.f32 %v1200, 0.35355338
    %v1207 = vadd.f32 %v1205, %v202
    %v1208 = vadd.f32 %v1206, %v206
    %v1209 = vsel %vm212, %v1207, -inf
    %1210 = vmax.xlane.f32.xlu0 %v1209
    %v1211 = vpop.xlane.xlu0 %1210
    %v1212 = vsel %vm212, %v1208, -inf
    %1213 = vmax.xlane.f32.xlu0 %v1212
    %v1214 = vpop.xlane.xlu0 %1213
    %v1215 = vsub.f32 %v1207, %v1211
    %v1216 = vsub.f32 %v1208, %v1214
    %v1217 = vmul.f32 %v1215, 1.442695
    %v1218 = vpow.pop %v1217
    %v1219 = vmul.f32 %v1216, 1.442695
    %v1220 = vpow.pop %v1219
    %v1221 = vsel %vm212, %v1218, 0.0
    %1222 = vadd.xlane.f32.xlu0 %v1221
    %v1223 = vpop.xlane.xlu0 %1222
    %v1224 = vsel %vm212, %v1220, 0.0
    %1225 = vadd.xlane.f32.xlu0 %v1224
    %v1226 = vpop.xlane.xlu0 %1225
    %v1227 = vrcp.pop %v1223
    %v1228 = vrcp.pop %v1226
    %v1229 = vmul.f32 %v1218, %v1227
    %v1230 = vmul.f32 %v1220, %v1228
    %v1231 = vpack.c.bf16 %v1229, %v1229
    %v1232 = vpack.c.bf16 %v1230, %v1230
    %v1233 = vrot.slane %v191, 4
    %v1235 = vsel %vm212, %v1231, 0
    %v1238 = vsel %vm341, %v1233, 0
    %1240 = vmatprep.subr.bf16.mxu0 0
    %1241 = vmatpush1.bf16.msra.mxu0 0
    %1242 = vmatprep.subr.bf16.mxu0 0
    %1243 = vmatpush1.bf16.msra.mxu0 0
    %1244 = vmatprep.subr.bf16.mxu0 0
    %1245 = vmatpush1.bf16.msra.mxu0 0
    %1246 = vmatprep.subr.bf16.mxu0 0
    %1247 = vmatpush1.bf16.msra.mxu0 0
    %1248 = vmatprep.subr.bf16.mxu0 0
    %1249 = vmatpush1.bf16.msra.mxu0 0
    %1250 = vmatprep.subr.bf16.mxu0 0
    %1251 = vmatpush1.bf16.msra.mxu0 0
    %1252 = vmatprep.subr.bf16.mxu0 0
    %1253 = vmatpush1.bf16.msra.mxu0 0
    %1254 = vmatprep.subr.bf16.mxu0 0
    %1255 = vmatpush1.bf16.msra.mxu0 %v1238
    %1256 = vmatprep.subr.bf16.mxu0 0
    %1257 = vmatpush2.bf16.msra.mxu0 0
    %1258 = vmatprep.subr.bf16.mxu0 0
    %1259 = vmatpush2.bf16.msra.mxu0 0
    %1260 = vmatprep.subr.bf16.mxu0 0
    %1261 = vmatpush2.bf16.msra.mxu0 0
    %1262 = vmatprep.subr.bf16.mxu0 0
    %1263 = vmatpush2.bf16.msra.mxu0 0
    %1264 = vmatprep.subr.bf16.mxu0 0
    %1265 = vmatpush2.bf16.msra.mxu0 0
    %1266 = vmatprep.subr.bf16.mxu0 0
    %1267 = vmatpush2.bf16.msra.mxu0 0
    %1268 = vmatprep.subr.bf16.mxu0 0
    %1269 = vmatpush2.bf16.msra.mxu0 0
    %1270 = vmatprep.subr.bf16.mxu0 0
    %1271 = vmatpush2.bf16.msra.mxu0 0
    %1272 = vmatprep.mubr.bf16.mxu0 0
    %1273 = vmatmul.mubr.bf16.gmra.mxu0 %v1235
    %v1274 = vpop.f32.mrf.mxu0
    %v1275 = vadd.f32 0.0, %v1274
    %v1276 = vpop.f32.mrf.mxu0
    %v1277 = vpop.f32.mrf.mxu0
    %v1278 = vpop.f32.mrf.mxu0
    %1279 = vdwg.mxu0
    %v1280 = vrot.slane %v192, 4
    %v1282 = vsel %vm212, %v1232, 0
    %v1285 = vsel %vm341, %v1280, 0
    %1287 = vmatprep.subr.bf16.mxu0 0
    %1288 = vmatpush1.bf16.msra.mxu0 0
    %1289 = vmatprep.subr.bf16.mxu0 0
    %1290 = vmatpush1.bf16.msra.mxu0 0
    %1291 = vmatprep.subr.bf16.mxu0 0
    %1292 = vmatpush1.bf16.msra.mxu0 0
    %1293 = vmatprep.subr.bf16.mxu0 0
    %1294 = vmatpush1.bf16.msra.mxu0 0
    %1295 = vmatprep.subr.bf16.mxu0 0
    %1296 = vmatpush1.bf16.msra.mxu0 0
    %1297 = vmatprep.subr.bf16.mxu0 0
    %1298 = vmatpush1.bf16.msra.mxu0 0
    %1299 = vmatprep.subr.bf16.mxu0 0
    %1300 = vmatpush1.bf16.msra.mxu0 0
    %1301 = vmatprep.subr.bf16.mxu0 0
    %1302 = vmatpush1.bf16.msra.mxu0 %v1285
    %1303 = vmatprep.subr.bf16.mxu0 0
    %1304 = vmatpush2.bf16.msra.mxu0 0
    %1305 = vmatprep.subr.bf16.mxu0 0
    %1306 = vmatpush2.bf16.msra.mxu0 0
    %1307 = vmatprep.subr.bf16.mxu0 0
    %1308 = vmatpush2.bf16.msra.mxu0 0
    %1309 = vmatprep.subr.bf16.mxu0 0
    %1310 = vmatpush2.bf16.msra.mxu0 0
    %1311 = vmatprep.subr.bf16.mxu0 0
    %1312 = vmatpush2.bf16.msra.mxu0 0
    %1313 = vmatprep.subr.bf16.mxu0 0
    %1314 = vmatpush2.bf16.msra.mxu0 0
    %1315 = vmatprep.subr.bf16.mxu0 0
    %1316 = vmatpush2.bf16.msra.mxu0 0
    %1317 = vmatprep.subr.bf16.mxu0 0
    %1318 = vmatpush2.bf16.msra.mxu0 0
    %1319 = vmatprep.mubr.bf16.mxu0 0
    %1320 = vmatmul.mubr.bf16.gmra.mxu0 %v1282
    %v1321 = vpop.f32.mrf.mxu0
    %v1322 = vadd.f32 0.0, %v1321
    %v1323 = vpop.f32.mrf.mxu0
    %v1324 = vpop.f32.mrf.mxu0
    %v1325 = vpop.f32.mrf.mxu0
    %1326 = vdwg.mxu0
    %1327 = vrot.lane.b32.xlu0 %v209, 88
    %v1328 = vpop.permute.xlu0 %1327
    %1329 = vrot.lane.b32.xlu0 %v209, 40
    %v1330 = vpop.permute.xlu0 %1329
    %v1332 = vsel %vm212, %v1328, 0
    %v1335 = vsel %vm212, %v1330, 0
    %1337 = vmatprep.subr.bf16.mxu0 0
    %1338 = vmatpush1.bf16.xpose.msra.mxu0 0
    %1339 = vmatprep.subr.bf16.mxu0 0
    %1340 = vmatpush1.bf16.xpose.msra.mxu0 0
    %1341 = vmatprep.subr.bf16.mxu0 0
    %1342 = vmatpush1.bf16.xpose.msra.mxu0 0
    %1343 = vmatprep.subr.bf16.mxu0 0
    %1344 = vmatpush1.bf16.xpose.msra.mxu0 0
    %1345 = vmatprep.subr.bf16.mxu0 0
    %1346 = vmatpush1.bf16.xpose.msra.mxu0 0
    %1347 = vmatprep.subr.bf16.mxu0 0
    %1348 = vmatpush1.bf16.xpose.msra.mxu0 0
    %1349 = vmatprep.subr.bf16.mxu0 0
    %1350 = vmatpush1.bf16.xpose.msra.mxu0 0
    %1351 = vmatprep.subr.bf16.mxu0 0
    %1352 = vmatpush1.bf16.xpose.msra.mxu0 %v1335
    %1353 = vmatprep.subr.bf16.mxu0 0
    %1354 = vmatpush2.bf16.xpose.msra.mxu0 0
    %1355 = vmatprep.subr.bf16.mxu0 0
    %1356 = vmatpush2.bf16.xpose.msra.mxu0 0
    %1357 = vmatprep.subr.bf16.mxu0 0
    %1358 = vmatpush2.bf16.xpose.msra.mxu0 0
    %1359 = vmatprep.subr.bf16.mxu0 0
    %1360 = vmatpush2.bf16.xpose.msra.mxu0 0
    %1361 = vmatprep.subr.bf16.mxu0 0
    %1362 = vmatpush2.bf16.xpose.msra.mxu0 0
    %1363 = vmatprep.subr.bf16.mxu0 0
    %1364 = vmatpush2.bf16.xpose.msra.mxu0 0
    %1365 = vmatprep.subr.bf16.mxu0 0
    %1366 = vmatpush2.bf16.xpose.msra.mxu0 0
    %1367 = vmatprep.subr.bf16.mxu0 0
    %1368 = vmatpush2.bf16.xpose.msra.mxu0 0
    %1369 = vmatprep.mubr.bf16.mxu0 0
    %1370 = vmatmul.mubr.bf16.gmra.mxu0 %v1332
    %v1371 = vpop.f32.mrf.mxu0
    %v1372 = vadd.f32 0.0, %v1371
    %v1373 = vpop.f32.mrf.mxu0
    %v1374 = vpop.f32.mrf.mxu0
    %v1375 = vpop.f32.mrf.mxu0
    %1376 = vdwg.mxu0
    %1377 = vrot.lane.b32.xlu0 %v259, 88
    %v1378 = vpop.permute.xlu0 %1377
    %1379 = vrot.lane.b32.xlu0 %v259, 40
    %v1380 = vpop.permute.xlu0 %1379
    %v1382 = vsel %vm212, %v1378, 0
    %v1385 = vsel %vm212, %v1380, 0
    %1387 = vmatprep.subr.bf16.mxu0 0
    %1388 = vmatpush1.bf16.xpose.msra.mxu0 0
    %1389 = vmatprep.subr.bf16.mxu0 0
    %1390 = vmatpush1.bf16.xpose.msra.mxu0 0
    %1391 = vmatprep.subr.bf16.mxu0 0
    %1392 = vmatpush1.bf16.xpose.msra.mxu0 0
    %1393 = vmatprep.subr.bf16.mxu0 0
    %1394 = vmatpush1.bf16.xpose.msra.mxu0 0
    %1395 = vmatprep.subr.bf16.mxu0 0
    %1396 = vmatpush1.bf16.xpose.msra.mxu0 0
    %1397 = vmatprep.subr.bf16.mxu0 0
    %1398 = vmatpush1.bf16.xpose.msra.mxu0 0
    %1399 = vmatprep.subr.bf16.mxu0 0
    %1400 = vmatpush1.bf16.xpose.msra.mxu0 0
    %1401 = vmatprep.subr.bf16.mxu0 0
    %1402 = vmatpush1.bf16.xpose.msra.mxu0 %v1385
    %1403 = vmatprep.subr.bf16.mxu0 0
    %1404 = vmatpush2.bf16.xpose.msra.mxu0 0
    %1405 = vmatprep.subr.bf16.mxu0 0
    %1406 = vmatpush2.bf16.xpose.msra.mxu0 0
    %1407 = vmatprep.subr.bf16.mxu0 0
    %1408 = vmatpush2.bf16.xpose.msra.mxu0 0
    %1409 = vmatprep.subr.bf16.mxu0 0
    %1410 = vmatpush2.bf16.xpose.msra.mxu0 0
    %1411 = vmatprep.subr.bf16.mxu0 0
    %1412 = vmatpush2.bf16.xpose.msra.mxu0 0
    %1413 = vmatprep.subr.bf16.mxu0 0
    %1414 = vmatpush2.bf16.xpose.msra.mxu0 0
    %1415 = vmatprep.subr.bf16.mxu0 0
    %1416 = vmatpush2.bf16.xpose.msra.mxu0 0
    %1417 = vmatprep.subr.bf16.mxu0 0
    %1418 = vmatpush2.bf16.xpose.msra.mxu0 0
    %1419 = vmatprep.mubr.bf16.mxu0 0
    %1420 = vmatmul.mubr.bf16.gmra.mxu0 %v1382
    %v1421 = vpop.f32.mrf.mxu0
    %v1422 = vadd.f32 0.0, %v1421
    %v1423 = vpop.f32.mrf.mxu0
    %v1424 = vpop.f32.mrf.mxu0
    %v1425 = vpop.f32.mrf.mxu0
    %1426 = vdwg.mxu0
    %v1427 = vmul.f32 %v1372, 0.35355338
    %v1428 = vmul.f32 %v1422, 0.35355338
    %v1429 = vadd.f32 %v1427, %v202
    %v1430 = vadd.f32 %v1428, %v206
    %v1431 = vsel %vm212, %v1429, -inf
    %1432 = vmax.xlane.f32.xlu0 %v1431
    %v1433 = vpop.xlane.xlu0 %1432
    %v1434 = vsel %vm212, %v1430, -inf
    %1435 = vmax.xlane.f32.xlu0 %v1434
    %v1436 = vpop.xlane.xlu0 %1435
    %v1437 = vsub.f32 %v1429, %v1433
    %v1438 = vsub.f32 %v1430, %v1436
    %v1439 = vmul.f32 %v1437, 1.442695
    %v1440 = vpow.pop %v1439
    %v1441 = vmul.f32 %v1438, 1.442695
    %v1442 = vpow.pop %v1441
    %v1443 = vsel %vm212, %v1440, 0.0
    %1444 = vadd.xlane.f32.xlu0 %v1443
    %v1445 = vpop.xlane.xlu0 %1444
    %v1446 = vsel %vm212, %v1442, 0.0
    %1447 = vadd.xlane.f32.xlu0 %v1446
    %v1448 = vpop.xlane.xlu0 %1447
    %v1449 = vrcp.pop %v1445
    %v1450 = vrcp.pop %v1448
    %v1451 = vmul.f32 %v1440, %v1449
    %v1452 = vmul.f32 %v1442, %v1450
    %v1453 = vpack.c.bf16 %v1451, %v1451
    %v1454 = vpack.c.bf16 %v1452, %v1452
    %1455 = vrot.lane.b32.xlu0 %v191, 120
    %v1456 = vpop.permute.xlu0 %1455
    %v1457 = vrot.slane %v1456, 4
    %v1459 = vsel %vm212, %v1453, 0
    %v1462 = vsel %vm341, %v1457, 0
    %1464 = vmatprep.subr.bf16.mxu0 0
    %1465 = vmatpush1.bf16.msra.mxu0 0
    %1466 = vmatprep.subr.bf16.mxu0 0
    %1467 = vmatpush1.bf16.msra.mxu0 0
    %1468 = vmatprep.subr.bf16.mxu0 0
    %1469 = vmatpush1.bf16.msra.mxu0 0
    %1470 = vmatprep.subr.bf16.mxu0 0
    %1471 = vmatpush1.bf16.msra.mxu0 0
    %1472 = vmatprep.subr.bf16.mxu0 0
    %1473 = vmatpush1.bf16.msra.mxu0 0
    %1474 = vmatprep.subr.bf16.mxu0 0
    %1475 = vmatpush1.bf16.msra.mxu0 0
    %1476 = vmatprep.subr.bf16.mxu0 0
    %1477 = vmatpush1.bf16.msra.mxu0 0
    %1478 = vmatprep.subr.bf16.mxu0 0
    %1479 = vmatpush1.bf16.msra.mxu0 %v1462
    %1480 = vmatprep.subr.bf16.mxu0 0
    %1481 = vmatpush2.bf16.msra.mxu0 0
    %1482 = vmatprep.subr.bf16.mxu0 0
    %1483 = vmatpush2.bf16.msra.mxu0 0
    %1484 = vmatprep.subr.bf16.mxu0 0
    %1485 = vmatpush2.bf16.msra.mxu0 0
    %1486 = vmatprep.subr.bf16.mxu0 0
    %1487 = vmatpush2.bf16.msra.mxu0 0
    %1488 = vmatprep.subr.bf16.mxu0 0
    %1489 = vmatpush2.bf16.msra.mxu0 0
    %1490 = vmatprep.subr.bf16.mxu0 0
    %1491 = vmatpush2.bf16.msra.mxu0 0
    %1492 = vmatprep.subr.bf16.mxu0 0
    %1493 = vmatpush2.bf16.msra.mxu0 0
    %1494 = vmatprep.subr.bf16.mxu0 0
    %1495 = vmatpush2.bf16.msra.mxu0 0
    %1496 = vmatprep.mubr.bf16.mxu0 0
    %1497 = vmatmul.mubr.bf16.gmra.mxu0 %v1459
    %v1498 = vpop.f32.mrf.mxu0
    %v1499 = vadd.f32 0.0, %v1498
    %v1500 = vpop.f32.mrf.mxu0
    %v1501 = vpop.f32.mrf.mxu0
    %v1502 = vpop.f32.mrf.mxu0
    %1503 = vdwg.mxu0
    %1504 = vrot.lane.b32.xlu0 %v192, 120
    %v1505 = vpop.permute.xlu0 %1504
    %v1506 = vrot.slane %v1505, 4
    %v1508 = vsel %vm212, %v1454, 0
    %v1511 = vsel %vm341, %v1506, 0
    %1513 = vmatprep.subr.bf16.mxu0 0
    %1514 = vmatpush1.bf16.msra.mxu0 0
    %1515 = vmatprep.subr.bf16.mxu0 0
    %1516 = vmatpush1.bf16.msra.mxu0 0
    %1517 = vmatprep.subr.bf16.mxu0 0
    %1518 = vmatpush1.bf16.msra.mxu0 0
    %1519 = vmatprep.subr.bf16.mxu0 0
    %1520 = vmatpush1.bf16.msra.mxu0 0
    %1521 = vmatprep.subr.bf16.mxu0 0
    %1522 = vmatpush1.bf16.msra.mxu0 0
    %1523 = vmatprep.subr.bf16.mxu0 0
    %1524 = vmatpush1.bf16.msra.mxu0 0
    %1525 = vmatprep.subr.bf16.mxu0 0
    %1526 = vmatpush1.bf16.msra.mxu0 0
    %1527 = vmatprep.subr.bf16.mxu0 0
    %1528 = vmatpush1.bf16.msra.mxu0 %v1511
    %1529 = vmatprep.subr.bf16.mxu0 0
    %1530 = vmatpush2.bf16.msra.mxu0 0
    %1531 = vmatprep.subr.bf16.mxu0 0
    %1532 = vmatpush2.bf16.msra.mxu0 0
    %1533 = vmatprep.subr.bf16.mxu0 0
    %1534 = vmatpush2.bf16.msra.mxu0 0
    %1535 = vmatprep.subr.bf16.mxu0 0
    %1536 = vmatpush2.bf16.msra.mxu0 0
    %1537 = vmatprep.subr.bf16.mxu0 0
    %1538 = vmatpush2.bf16.msra.mxu0 0
    %1539 = vmatprep.subr.bf16.mxu0 0
    %1540 = vmatpush2.bf16.msra.mxu0 0
    %1541 = vmatprep.subr.bf16.mxu0 0
    %1542 = vmatpush2.bf16.msra.mxu0 0
    %1543 = vmatprep.subr.bf16.mxu0 0
    %1544 = vmatpush2.bf16.msra.mxu0 0
    %1545 = vmatprep.mubr.bf16.mxu0 0
    %1546 = vmatmul.mubr.bf16.gmra.mxu0 %v1508
    %v1547 = vpop.f32.mrf.mxu0
    %v1548 = vadd.f32 0.0, %v1547
    %v1549 = vpop.f32.mrf.mxu0
    %v1550 = vpop.f32.mrf.mxu0
    %v1551 = vpop.f32.mrf.mxu0
    %1552 = vdwg.mxu0
    %1555 = vrot.lane.b32.xlu0 %v604, 8
    %v1556 = vpop.permute.xlu0 %1555
    %1557 = vrot.lane.b32.xlu0 %v652, 8
    %v1558 = vpop.permute.xlu0 %1557
    %1563 = vrot.lane.b32.xlu0 %v828, 16
    %v1564 = vpop.permute.xlu0 %1563
    %1565 = vrot.lane.b32.xlu0 %v876, 16
    %v1566 = vpop.permute.xlu0 %1565
    %1571 = vrot.lane.b32.xlu0 %v1052, 24
    %v1572 = vpop.permute.xlu0 %1571
    %1573 = vrot.lane.b32.xlu0 %v1100, 24
    %v1574 = vpop.permute.xlu0 %1573
    %1579 = vrot.lane.b32.xlu0 %v1275, 32
    %v1580 = vpop.permute.xlu0 %1579
    %1581 = vrot.lane.b32.xlu0 %v1322, 32
    %v1582 = vpop.permute.xlu0 %1581
    %1587 = vrot.lane.b32.xlu0 %v1499, 40
    %v1588 = vpop.permute.xlu0 %1587
    %1589 = vrot.lane.b32.xlu0 %v1548, 40
    %v1590 = vpop.permute.xlu0 %1589
    %v1593 = vsel %vm212, %v380, %v1556
    %v1594 = vsel %vm212, %v428, %v1558
    %vm1595 = vcmask 130048
    %v1596 = vsel %vm1595, %v1593, %v1564
    %v1597 = vsel %vm1595, %v1594, %v1566
    %vm1598 = vcmask 195584
    %v1599 = vsel %vm1598, %v1596, %v1572
    %v1600 = vsel %vm1598, %v1597, %v1574
    %vm1601 = vcmask 261120
    %v1602 = vsel %vm1601, %v1599, %v1580
    %v1603 = vsel %vm1601, %v1600, %v1582
    %vm1604 = vcmask 326656
    %v1605 = vsel %vm1604, %v1602, %v1588
    %v1606 = vsel %vm1604, %v1603, %v1590
    %v1607 = vpack.c.bf16 %v1606, %v1605
    %v1608 = vld [vmem:[%s7] sm:$0xf]
    %v1609 = vld [vmem:[%s7 + $0x4] sm:$0xf]
    %v1610 = vld [vmem:[%s7 + $0x8] sm:$0xf]
    %v1611 = vld [vmem:[%s7 + $0xc] sm:$0xf]
    %v1612 = vld [vmem:[%s7 + $0x10] sm:$0xf]
    %v1613 = vld [vmem:[%s7 + $0x14] sm:$0xf]
    %v1614 = vlaneseq
    %v1615 = vshrl.u32 %v1614, 7
    %v1616 = vsub.s32 6, %v1615
    %v1617 = vrot.slane %v45, %v1616
    %v1624 = vunpack.c.l.b16 %v1608
    %v1625 = vunpack.c.l.b16 %v1609
    %v1626 = vunpack.c.l.b16 %v1610
    %v1627 = vunpack.c.l.b16 %v1611
    %v1628 = vunpack.c.l.b16 %v1612
    %v1629 = vunpack.c.l.b16 %v1613
    %v1630 = vpack.c.b16 %v1625, %v1624
    %v1631 = vpack.c.b16 %v1627, %v1626
    %v1632 = vpack.c.b16 %v1629, %v1628
    %v1637 = vsel %vm48, %v1607, 0
    %1639 = vmatprep.subr.bf16.mxu0 0
    %1640 = vmatpush1.bf16.msra.mxu0 0
    %1641 = vmatprep.subr.bf16.mxu0 0
    %1642 = vmatpush1.bf16.msra.mxu0 0
    %1643 = vmatprep.subr.bf16.mxu0 0
    %1644 = vmatpush1.bf16.msra.mxu0 0
    %1645 = vmatprep.subr.bf16.mxu0 0
    %1646 = vmatpush1.bf16.msra.mxu0 0
    %1647 = vmatprep.subr.bf16.mxu0 0
    %1648 = vmatpush1.bf16.msra.mxu0 0
    %1649 = vmatprep.subr.bf16.mxu0 0
    %1650 = vmatpush1.bf16.msra.mxu0 %v1632
    %1651 = vmatprep.subr.bf16.mxu0 0
    %1652 = vmatpush1.bf16.msra.mxu0 %v1631
    %1653 = vmatprep.subr.bf16.mxu0 0
    %1654 = vmatpush1.bf16.msra.mxu0 %v1630
    %1655 = vmatprep.subr.bf16.mxu0 0
    %1656 = vmatpush2.bf16.msra.mxu0 0
    %1657 = vmatprep.subr.bf16.mxu0 0
    %1658 = vmatpush2.bf16.msra.mxu0 0
    %1659 = vmatprep.subr.bf16.mxu0 0
    %1660 = vmatpush2.bf16.msra.mxu0 0
    %1661 = vmatprep.subr.bf16.mxu0 0
    %1662 = vmatpush2.bf16.msra.mxu0 0
    %1663 = vmatprep.subr.bf16.mxu0 0
    %1664 = vmatpush2.bf16.msra.mxu0 0
    %1665 = vmatprep.subr.bf16.mxu0 0
    %1666 = vmatpush2.bf16.msra.mxu0 0
    %1667 = vmatprep.subr.bf16.mxu0 0
    %1668 = vmatpush2.bf16.msra.mxu0 0
    %1669 = vmatprep.subr.bf16.mxu0 0
    %1670 = vmatpush2.bf16.msra.mxu0 0
    %1671 = vmatprep.mubr.bf16.mxu0 0
    %1672 = vmatmul.mubr.bf16.gmra.mxu0 %v1637
    %v1673 = vpop.f32.mrf.mxu0
    %v1674 = vadd.f32 %v1617, %v1673
    %v1675 = vpop.f32.mrf.mxu0
    %v1676 = vpop.f32.mrf.mxu0
    %v1677 = vadd.f32 %v1617, %v1676
    %v1678 = vpop.f32.mrf.mxu0
    %1679 = vdwg.mxu0
    %v1680 = vadd.f32 %v86, %v1674
    %v1681 = vadd.f32 %v87, %v1677
    %v1682 = vsel %vm48, %v1680, 0.0
    %1683 = vadd.xlane.f32.xlu0 %v1682
    %v1684 = vpop.xlane.xlu0 %1683
    %v1685 = vsel %vm48, %v1681, 0.0
    %1686 = vadd.xlane.f32.xlu0 %v1685
    %v1687 = vpop.xlane.xlu0 %1686
    %v1688 = vmul.f32 %v1684, %v55
    %v1689 = vmul.f32 %v1687, %v55
    %v1690 = vsub.f32 %v1680, %v1688
    %v1691 = vsub.f32 %v1681, %v1689
    %v1692 = vmul.f32 %v1690, %v1690
    %v1693 = vmul.f32 %v1691, %v1691
    %v1694 = vsel %vm48, %v1692, 0.0
    %1695 = vadd.xlane.f32.xlu0 %v1694
    %v1696 = vpop.xlane.xlu0 %1695
    %v1697 = vsel %vm48, %v1693, 0.0
    %1698 = vadd.xlane.f32.xlu0 %v1697
    %v1699 = vpop.xlane.xlu0 %1698
    %v1700 = vmul.f32 %v1696, %v55
    %v1701 = vmul.f32 %v1699, %v55
    %v1702 = vadd.f32 %v1700, 1e-05
    %v1703 = vadd.f32 %v1701, 1e-05
    %v1704 = vrsqrt.pop %v1702
    %v1705 = vrsqrt.pop %v1703
    %v1706 = vmul.f32 %v1690, %v1704
    %v1707 = vmul.f32 %v1691, %v1705
    %v1708 = vlaneseq
    %v1709 = vshrl.u32 %v1708, 7
    %v1710 = vsub.s32 2, %v1709
    %v1711 = vrot.slane %v45, %v1710
    %v1712 = vmul.f32 %v1706, %v1711
    %v1713 = vmul.f32 %v1707, %v1711
    %v1714 = vlaneseq
    %v1715 = vshrl.u32 %v1714, 7
    %v1716 = vsub.s32 3, %v1715
    %v1717 = vrot.slane %v45, %v1716
    %v1718 = vadd.f32 %v1712, %v1717
    %v1719 = vadd.f32 %v1713, %v1717
    %v1720 = vpack.c.bf16 %v1719, %v1718
    %v1721 = vld [vmem:[%s8] sm:$0xf]
    %v1722 = vld [vmem:[%s8 + $0x4] sm:$0xf]
    %v1723 = vld [vmem:[%s8 + $0x8] sm:$0xf]
    %v1724 = vld [vmem:[%s8 + $0xc] sm:$0xf]
    %v1725 = vld [vmem:[%s8 + $0x10] sm:$0xf]
    %v1726 = vld [vmem:[%s8 + $0x14] sm:$0xf]
    %v1727 = vld [vmem:[%s9] sm:$0x1]
    %v1729 = vlaneseq
    %v1730 = vshrl.u32 %v1729, 7
    %v1731 = vsub.s32 0, %v1730
    %v1732 = vrot.slane %v1727, %v1731
    %v1740 = vunpack.c.l.b16 %v1721
    %v1741 = vunpack.c.l.b16 %v1722
    %v1742 = vunpack.c.l.b16 %v1723
    %v1743 = vunpack.c.l.b16 %v1724
    %v1744 = vunpack.c.l.b16 %v1725
    %v1745 = vunpack.c.l.b16 %v1726
    %v1746 = vpack.c.b16 %v1741, %v1740
    %v1747 = vpack.c.b16 %v1743, %v1742
    %v1748 = vpack.c.b16 %v1745, %v1744
    %v1753 = vsel %vm48, %v1720, 0
    %1755 = vmatprep.subr.bf16.mxu0 0
    %1756 = vmatpush1.bf16.msra.mxu0 0
    %1757 = vmatprep.subr.bf16.mxu0 0
    %1758 = vmatpush1.bf16.msra.mxu0 0
    %1759 = vmatprep.subr.bf16.mxu0 0
    %1760 = vmatpush1.bf16.msra.mxu0 0
    %1761 = vmatprep.subr.bf16.mxu0 0
    %1762 = vmatpush1.bf16.msra.mxu0 0
    %1763 = vmatprep.subr.bf16.mxu0 0
    %1764 = vmatpush1.bf16.msra.mxu0 0
    %1765 = vmatprep.subr.bf16.mxu0 0
    %1766 = vmatpush1.bf16.msra.mxu0 %v1748
    %1767 = vmatprep.subr.bf16.mxu0 0
    %1768 = vmatpush1.bf16.msra.mxu0 %v1747
    %1769 = vmatprep.subr.bf16.mxu0 0
    %1770 = vmatpush1.bf16.msra.mxu0 %v1746
    %1771 = vmatprep.subr.bf16.mxu0 0
    %1772 = vmatpush2.bf16.msra.mxu0 0
    %1773 = vmatprep.subr.bf16.mxu0 0
    %1774 = vmatpush2.bf16.msra.mxu0 0
    %1775 = vmatprep.subr.bf16.mxu0 0
    %1776 = vmatpush2.bf16.msra.mxu0 0
    %1777 = vmatprep.subr.bf16.mxu0 0
    %1778 = vmatpush2.bf16.msra.mxu0 0
    %1779 = vmatprep.subr.bf16.mxu0 0
    %1780 = vmatpush2.bf16.msra.mxu0 0
    %1781 = vmatprep.subr.bf16.mxu0 0
    %1782 = vmatpush2.bf16.msra.mxu0 0
    %1783 = vmatprep.subr.bf16.mxu0 0
    %1784 = vmatpush2.bf16.msra.mxu0 0
    %1785 = vmatprep.subr.bf16.mxu0 0
    %1786 = vmatpush2.bf16.msra.mxu0 0
    %1787 = vmatprep.mubr.bf16.mxu0 0
    %1788 = vmatmul.mubr.bf16.gmra.mxu0 %v1753
    %v1789 = vpop.f32.mrf.mxu0
    %v1790 = vadd.f32 %v1732, %v1789
    %v1791 = vpop.f32.mrf.mxu0
    %v1792 = vpop.f32.mrf.mxu0
    %v1793 = vadd.f32 %v1732, %v1792
    %v1794 = vpop.f32.mrf.mxu0
    %1795 = vdwg.mxu0
    %v1796 = vmax.f32 %v1790, 0.0
    %v1797 = vmax.f32 %v1793, 0.0
    %v1798 = vpack.c.bf16 %v1797, %v1796
    %v1799 = vld [vmem:[%s10] sm:$0xf]
    %v1800 = vld [vmem:[%s10 + $0x4] sm:$0xf]
    %v1801 = vld [vmem:[%s10 + $0x8] sm:$0xf]
    %v1802 = vld [vmem:[%s10 + $0xc] sm:$0xf]
    %v1803 = vld [vmem:[%s10 + $0x10] sm:$0xf]
    %v1804 = vld [vmem:[%s10 + $0x14] sm:$0xf]
    %v1805 = vld [vmem:[%s10 + $0x18] sm:$0xf]
    %v1806 = vld [vmem:[%s10 + $0x1c] sm:$0xf]
    %v1807 = vld [vmem:[%s10 + $0x20] sm:$0xf]
    %v1808 = vld [vmem:[%s10 + $0x24] sm:$0xf]
    %v1809 = vld [vmem:[%s10 + $0x28] sm:$0xf]
    %v1810 = vld [vmem:[%s10 + $0x2c] sm:$0xf]
    %v1811 = vld [vmem:[%s10 + $0x30] sm:$0xf]
    %v1812 = vld [vmem:[%s10 + $0x34] sm:$0xf]
    %v1813 = vld [vmem:[%s10 + $0x38] sm:$0xf]
    %v1814 = vld [vmem:[%s10 + $0x3c] sm:$0xf]
    %v1815 = vlaneseq
    %v1816 = vshrl.u32 %v1815, 7
    %v1817 = vsub.s32 7, %v1816
    %v1818 = vrot.slane %v45, %v1817
    %v1835 = vunpack.c.l.b16 %v1799
    %v1836 = vunpack.c.l.b16 %v1800
    %v1837 = vunpack.c.l.b16 %v1801
    %v1838 = vunpack.c.l.b16 %v1802
    %v1839 = vunpack.c.l.b16 %v1803
    %v1840 = vunpack.c.l.b16 %v1804
    %v1841 = vunpack.c.l.b16 %v1805
    %v1842 = vunpack.c.l.b16 %v1806
    %v1843 = vunpack.c.l.b16 %v1807
    %v1844 = vunpack.c.l.b16 %v1808
    %v1845 = vunpack.c.l.b16 %v1809
    %v1846 = vunpack.c.l.b16 %v1810
    %v1847 = vunpack.c.l.b16 %v1811
    %v1848 = vunpack.c.l.b16 %v1812
    %v1849 = vunpack.c.l.b16 %v1813
    %v1850 = vunpack.c.l.b16 %v1814
    %v1851 = vpack.c.b16 %v1836, %v1835
    %v1852 = vpack.c.b16 %v1838, %v1837
    %v1853 = vpack.c.b16 %v1840, %v1839
    %v1854 = vpack.c.b16 %v1842, %v1841
    %v1855 = vpack.c.b16 %v1844, %v1843
    %v1856 = vpack.c.b16 %v1846, %v1845
    %v1857 = vpack.c.b16 %v1848, %v1847
    %v1858 = vpack.c.b16 %v1850, %v1849
    %1867 = vmatprep.subr.bf16.mxu0 0
    %1868 = vmatpush1.bf16.msra.mxu0 %v1858
    %1869 = vmatprep.subr.bf16.mxu0 0
    %1870 = vmatpush1.bf16.msra.mxu0 %v1857
    %1871 = vmatprep.subr.bf16.mxu0 0
    %1872 = vmatpush1.bf16.msra.mxu0 %v1856
    %1873 = vmatprep.subr.bf16.mxu0 0
    %1874 = vmatpush1.bf16.msra.mxu0 %v1855
    %1875 = vmatprep.subr.bf16.mxu0 0
    %1876 = vmatpush1.bf16.msra.mxu0 %v1854
    %1877 = vmatprep.subr.bf16.mxu0 0
    %1878 = vmatpush1.bf16.msra.mxu0 %v1853
    %1879 = vmatprep.subr.bf16.mxu0 0
    %1880 = vmatpush1.bf16.msra.mxu0 %v1852
    %1881 = vmatprep.subr.bf16.mxu0 0
    %1882 = vmatpush1.bf16.msra.mxu0 %v1851
    %1883 = vmatprep.subr.bf16.mxu0 0
    %1884 = vmatpush2.bf16.msra.mxu0 0
    %1885 = vmatprep.subr.bf16.mxu0 0
    %1886 = vmatpush2.bf16.msra.mxu0 0
    %1887 = vmatprep.subr.bf16.mxu0 0
    %1888 = vmatpush2.bf16.msra.mxu0 0
    %1889 = vmatprep.subr.bf16.mxu0 0
    %1890 = vmatpush2.bf16.msra.mxu0 0
    %1891 = vmatprep.subr.bf16.mxu0 0
    %1892 = vmatpush2.bf16.msra.mxu0 0
    %1893 = vmatprep.subr.bf16.mxu0 0
    %1894 = vmatpush2.bf16.msra.mxu0 0
    %1895 = vmatprep.subr.bf16.mxu0 0
    %1896 = vmatpush2.bf16.msra.mxu0 0
    %1897 = vmatprep.subr.bf16.mxu0 0
    %1898 = vmatpush2.bf16.msra.mxu0 0
    %1899 = vmatprep.mubr.bf16.mxu0 0
    %1900 = vmatmul.mubr.bf16.gmra.mxu0 %v1798
    %v1901 = vpop.f32.mrf.mxu0
    %v1902 = vadd.f32 %v1818, %v1901
    %v1903 = vpop.f32.mrf.mxu0
    %v1904 = vpop.f32.mrf.mxu0
    %v1905 = vadd.f32 %v1818, %v1904
    %v1906 = vpop.f32.mrf.mxu0
    %1907 = vdwg.mxu0
    %v1908 = vadd.f32 %v1718, %v1902
    %v1909 = vadd.f32 %v1719, %v1905
    %v1910 = vsel %vm48, %v1908, 0.0
    %1911 = vadd.xlane.f32.xlu0 %v1910
    %v1912 = vpop.xlane.xlu0 %1911
    %v1913 = vsel %vm48, %v1909, 0.0
    %1914 = vadd.xlane.f32.xlu0 %v1913
    %v1915 = vpop.xlane.xlu0 %1914
    %v1916 = vmul.f32 %v1912, %v55
    %v1917 = vmul.f32 %v1915, %v55
    %v1918 = vsub.f32 %v1908, %v1916
    %v1919 = vsub.f32 %v1909, %v1917
    %v1920 = vmul.f32 %v1918, %v1918
    %v1921 = vmul.f32 %v1919, %v1919
    %v1922 = vsel %vm48, %v1920, 0.0
    %1923 = vadd.xlane.f32.xlu0 %v1922
    %v1924 = vpop.xlane.xlu0 %1923
    %v1925 = vsel %vm48, %v1921, 0.0
    %1926 = vadd.xlane.f32.xlu0 %v1925
    %v1927 = vpop.xlane.xlu0 %1926
    %v1928 = vmul.f32 %v1924, %v55
    %v1929 = vmul.f32 %v1927, %v55
    %v1930 = vadd.f32 %v1928, 1e-05
    %v1931 = vadd.f32 %v1929, 1e-05
    %v1932 = vrsqrt.pop %v1930
    %v1933 = vrsqrt.pop %v1931
    %v1934 = vmul.f32 %v1918, %v1932
    %v1935 = vmul.f32 %v1919, %v1933
    %v1936 = vlaneseq
    %v1937 = vshrl.u32 %v1936, 7
    %v1938 = vsub.s32 4, %v1937
    %v1939 = vrot.slane %v45, %v1938
    %v1940 = vmul.f32 %v1934, %v1939
    %v1941 = vmul.f32 %v1935, %v1939
    %v1942 = vlaneseq
    %v1943 = vshrl.u32 %v1942, 7
    %v1944 = vsub.s32 5, %v1943
    %v1945 = vrot.slane %v45, %v1944
    %v1946 = vadd.f32 %v1940, %v1945
    %v1947 = vadd.f32 %v1941, %v1945
    %v1948 = vld [vmem:[%s2] sm:$0xff]
    %v1949 = vld [vmem:[%s2 + $0x8] sm:$0xff]
    %v1950 = vsub.f32 1.0, %v1948
    %v1951 = vsub.f32 1.0, %v1949
    %1953 = vset.pattern.permute.xlu0 0
    %1954 = vperm.xlu0 %1953, %v1950
    %v1955 = vpop.permute.xlu0 %1954
    %1958 = vset.pattern.permute.xlu0 0
    %1959 = vperm.xlu0 %1958, %v1951
    %v1960 = vpop.permute.xlu0 %1959
    %v1962 = vmul.f32 %v1946, %v1955
    %v1963 = vmul.f32 %v1947, %v1960
    %v1964 = vsel %vm48, %v1962, 0.0
    %v1965 = vrot.slane %v1964, 4
    %v1966 = vadd.f32 %v1964, %v1965
    %v1967 = vrot.slane %v1966, 2
    %v1968 = vadd.f32 %v1966, %v1967
    %v1969 = vrot.slane %v1968, 1
    %v1970 = vadd.f32 %v1968, %v1969
    %v1971 = vsel %vm48, %v1963, 0.0
    %v1972 = vrot.slane %v1971, 4
    %v1973 = vadd.f32 %v1971, %v1972
    %v1974 = vrot.slane %v1973, 2
    %v1975 = vadd.f32 %v1973, %v1974
    %v1976 = vrot.slane %v1975, 1
    %v1977 = vadd.f32 %v1975, %v1976
    %vm1978 = vcmask 7168
    %v1979 = vsel %vm1978, %v1950, 0.0
    %v1980 = vrot.slane %v1979, 4
    %v1981 = vadd.f32 %v1979, %v1980
    %v1982 = vrot.slane %v1981, 2
    %v1983 = vadd.f32 %v1981, %v1982
    %v1984 = vrot.slane %v1983, 1
    %v1985 = vadd.f32 %v1983, %v1984
    %v1986 = vsel %vm1978, %v1951, 0.0
    %v1987 = vrot.slane %v1986, 4
    %v1988 = vadd.f32 %v1986, %v1987
    %v1989 = vrot.slane %v1988, 2
    %v1990 = vadd.f32 %v1988, %v1989
    %v1991 = vrot.slane %v1990, 1
    %v1992 = vadd.f32 %v1990, %v1991
    %v1993 = vmax.f32 %v1985, 1.0
    %v1994 = vmax.f32 %v1992, 1.0
    %1996 = vset.pattern.permute.xlu0 0
    %1997 = vperm.xlu0 %1996, %v1993
    %v1998 = vpop.permute.xlu0 %1997
    %2001 = vset.pattern.permute.xlu0 0
    %2002 = vperm.xlu0 %2001, %v1994
    %v2003 = vpop.permute.xlu0 %2002
    %v2005 = vrcp.pop %v1998
    %v2006 = vmul.f32 %v1970, %v2005
    %v2007 = vrcp.pop %v2003
    %v2008 = vmul.f32 %v1977, %v2007
    %vm2011 = vcmask 1041409
    %v2012 = vsel %vm2011, %v2008, %v2006
    %vm2014 = vcmask 386048
    %2015 = vst.msk [vmem:[#allocation2] sm:$0x3] %vm2014, %v2012
    // Predicated region
    $region46: #{transformer_layer.1} parent=1 // pred_check
      _
    $region47: #{transformer_layer.1} parent=1 // pred_check_branch
      %2017 = sbr.rel (0) target = $region49
    $region48: #{transformer_layer.1} parent=1 // pred_region
      %s2019 = ssub.s32 32, 32
      %2020 = vsyncadd [#allocation3], %s2019
      %s2022 = sshll.u32 [#allocation2], 4
      %s2023 = int_to_ptr.vmem [resolvable:$true] %s2022
      %2025 = dma.vmem_to_hbm [thread:$0]  %s2023, 32, %s11, [#allocation3]
    $region49: #{transformer_layer.1} parent=1 // pred_fallthru
      _
    // Predicated region
    $region50: #{transformer_layer.1} parent=1 // pred_check
      _
    $region51: #{transformer_layer.1} parent=1 // pred_check_branch
      %2027 = sbr.rel (0) target = $region53
    $region52: #{transformer_layer.1} parent=1 // pred_region
      %2028 = dma.done [#allocation3], 32
    $region53: #{transformer_layer.1} parent=1 // pred_fallthru
      _
    %2029 = vsyncpa [#allocation3], 1

</llo_original>
